<compile_context>
chip_gen: v5e
topology: v5e:2x2
jax: 0.10.0
libtpu: 0.0.40
codegen_flags: <defaults>
</compile_context>

<pallas_src>
import jax
import jax.numpy as jnp
from jax.experimental import pallas as pl
from jax.experimental.pallas import tpu as pltpu


def _stress_kernel(dists_ref, xi_ref, xjt_ref, ni_ref, nj_ref, o_ref, acc_ref):
    j = pl.program_id(1)

    @pl.when(j == 0)
    def _():
        acc_ref[...] = jnp.zeros_like(acc_ref)

    xi = xi_ref[...].astype(jnp.float32)       # (TM, D)   row features
    xjt = xjt_ref[...].astype(jnp.float32)     # (D, TN)   col features, pre-transposed

    # Pairwise Euclidean distances for this (TM, TN) tile via the MXU.
    ip = jnp.dot(xi, xjt, preferred_element_type=jnp.float32)        # (TM, TN)
    sq = jnp.maximum(ni_ref[...] + nj_ref[...] - 2.0 * ip, 0.0)      # (TM, TN)
    cd = jnp.sqrt(sq)

    diff = jnp.abs(dists_ref[...].astype(jnp.float32) - cd)          # (TM, TN)

    # Lane-dense partial-sum accumulation: fold TN into 128-wide lane-aligned
    # chunks with pure vreg adds (VPU); the single cross-lane (XLU) reduce and
    # the narrow (TM, 1) store happen only once per row block, below.
    tm, tn = diff.shape
    partial = diff[:, 0:128]
    for c in range(1, tn // 128):
        partial = partial + diff[:, c * 128:(c + 1) * 128]
    acc_ref[...] += partial

    @pl.when(j == pl.num_programs(1) - 1)
    def _():
        o_ref[...] = jnp.sum(acc_ref[...], axis=-1, keepdims=True).astype(o_ref.dtype)


def stress_forward(dists, features, *, tm=None, tn=None):
    """dists: (N, N) f32 (or bf16), features: (N, D) -> (N, 1) f32."""
    N, D = features.shape
    assert dists.shape == (N, N)

    # Default tiles: big enough to amortize per-step DMA overhead, small enough
    # that the double-buffered footprint stays far under v7x's 64 MiB VMEM and
    # N // tm >= 2 at realistic N so the row axis can shard across both v7x TCs.
    if tm is None:
        tm = min(256, N)
    if tn is None:
        tn = min(2048, N)
    assert N % tm == 0 and N % tn == 0, "N must be divisible by the tile sizes"
    assert tm % 8 == 0 and tn % 128 == 0

    feats32 = features.astype(jnp.float32)
    sqn = jnp.sum(feats32 * feats32, axis=-1)          # (N,) squared row norms
    ni = sqn[:, None]                                  # (N, 1)
    nj = sqn[None, :]                                  # (1, N)
    feats_t = jnp.transpose(feats32)                   # (D, N) lane-dense column operand

    # Explicit VMEM budget (double-buffered dists tile dominates); keep well
    # within the v7x 64 MiB physical VMEM.
    d_item = jnp.dtype(dists.dtype).itemsize
    vmem_bytes = (
        2 * tm * tn * d_item          # dists double buffer
        + 2 * tm * D * 4              # row features double buffer
        + 2 * D * tn * 4              # transposed col features double buffer
        + 2 * tm * 128 * 4            # row norms (lane-padded) double buffer
        + 2 * tn * 4                  # col norms double buffer
        + tm * 128 * 4                # lane-dense accumulator
        + 2 * tm * 128 * 4            # (tm, 1) output (lane-padded) double buffer
        + (2 << 20)                   # headroom
    )
    vmem_limit = int(min(max(vmem_bytes, 16 * 1024 * 1024), 64 * 1024 * 1024))

    grid = (N // tm, N // tn)
    return pl.pallas_call(
        _stress_kernel,
        out_shape=jax.ShapeDtypeStruct((N, 1), jnp.float32),
        grid_spec=pltpu.PrefetchScalarGridSpec(
            num_scalar_prefetch=0,
            grid=grid,
            in_specs=[
                pl.BlockSpec((tm, tn), lambda i, j: (i, j)),   # dists tile (streamed)
                pl.BlockSpec((tm, D), lambda i, j: (i, 0)),    # row features
                pl.BlockSpec((D, tn), lambda i, j: (0, j)),    # col features (D, TN)
                pl.BlockSpec((tm, 1), lambda i, j: (i, 0)),    # row squared norms
                pl.BlockSpec((1, tn), lambda i, j: (0, j)),    # col squared norms
            ],
            out_specs=pl.BlockSpec((tm, 1), lambda i, j: (i, 0)),
            scratch_shapes=[pltpu.VMEM((tm, 128), jnp.float32)],
        ),
        compiler_params=pltpu.CompilerParams(
            dimension_semantics=("parallel", "arbitrary"),
            vmem_limit_bytes=vmem_limit,
        ),
    )(dists, feats32, feats_t, ni, nj)


def _reference(dists, features):
    # pure-JAX reference of the PyTorch forward
    sqn = jnp.sum(features.astype(jnp.float32) ** 2, -1)
    d2 = sqn[:, None] + sqn[None, :] - 2.0 * features @ features.T
    cd = jnp.sqrt(jnp.maximum(d2, 0.0))
    return jnp.sum(jnp.abs(dists.astype(jnp.float32) - cd), axis=-1, keepdims=True)


if __name__ == "__main__":
    N, D = 512, 32
    key = jax.random.PRNGKey(0)
    k1, k2 = jax.random.split(key)

    features = jax.random.normal(k1, (N, D), dtype=jnp.float32)

    # Deterministic synthetic stand-in for self.dists (symmetric, non-negative,
    # zero diagonal), analogous to the geodesic-distance matrix init_helper builds.
    raw = jax.random.uniform(k2, (N, N), dtype=jnp.float32, minval=0.1, maxval=5.0)
    dists = 0.5 * (raw + raw.T)
    dists = dists * (1.0 - jnp.eye(N, dtype=jnp.float32))

    ref = _reference(dists, features)

    # Small-tile call exercises both grid axes (row-parallel + multi-step column
    # reduction with the lane-dense accumulator).
    out_small = jax.block_until_ready(stress_forward(dists, features, tm=128, tn=256))
    # Default (production) tile sizes, clamped to N.
    out_default = jax.block_until_ready(stress_forward(dists, features))

    for out in (out_small, out_default):
        assert out.shape == (N, 1)
        assert jnp.allclose(out, ref, rtol=1e-4, atol=1e-1), (
            float(jnp.max(jnp.abs(out - ref)))
        )

    print("KERNEL_OK")
</pallas_src>

<mosaic_0001>
module attributes {stable_mosaic.version = 11 : i64} {
  func.func @_stress_kernel(%arg0: i32, %arg1: i32, %arg2: memref<128x256xf32, #tpu.memory_space<vmem>>, %arg3: memref<128x32xf32, #tpu.memory_space<vmem>>, %arg4: memref<32x256xf32, #tpu.memory_space<vmem>>, %arg5: memref<128x1xf32, #tpu.memory_space<vmem>>, %arg6: memref<1x256xf32, #tpu.memory_space<vmem>>, %arg7: memref<128x1xf32, #tpu.memory_space<vmem>>, %arg8: memref<128x128xf32, #tpu.memory_space<vmem>>) attributes {dimension_semantics = [#tpu.dimension_semantics<parallel>, #tpu.dimension_semantics<arbitrary>], iteration_bounds = array<i64: 4, 2>, scalar_prefetch = 0 : i64, scratch_operands = 1 : i64, tpu.core_type = #tpu.core_type<tc>, window_params = [{transform_indices = @transform_0, window_bounds = array<i64: 128, 256>}, {transform_indices = @transform_1, window_bounds = array<i64: 128, 32>}, {transform_indices = @transform_2, window_bounds = array<i64: 32, 256>}, {transform_indices = @transform_3, window_bounds = array<i64: 128, 1>}, {transform_indices = @transform_4, window_bounds = array<i64: 1, 256>}, {transform_indices = @transform_5, window_bounds = array<i64: 128, 1>}]} {
    %c0_i32 = arith.constant 0 : i32
    %0 = arith.cmpi eq, %arg1, %c0_i32 : i32
    %1 = arith.extui %0 : i1 to i32
    %c0_i32_0 = arith.constant 0 : i32
    %2 = arith.cmpi ne, %1, %c0_i32_0 : i32
    scf.if %2 {
      %cst_17 = arith.constant 0.000000e+00 : f32
      %29 = vector.broadcast %cst_17 : f32 to vector<128x128xf32>
      %c0_18 = arith.constant 0 : index
      %c0_19 = arith.constant 0 : index
      %30 = vector.load %arg8[%c0_18, %c0_19] : memref<128x128xf32, #tpu.memory_space<vmem>>, vector<128x128xf32>
      tpu.vector_store %arg8[%c0_18, %c0_19], %29 {strides = array<i32>} : memref<128x128xf32, #tpu.memory_space<vmem>>, vector<128x128xf32>,
    } else {
    }
    %c0 = arith.constant 0 : index
    %c0_1 = arith.constant 0 : index
    %3 = vector.load %arg3[%c0, %c0_1] : memref<128x32xf32, #tpu.memory_space<vmem>>, vector<128x32xf32>
    %c0_2 = arith.constant 0 : index
    %c0_3 = arith.constant 0 : index
    %4 = vector.load %arg4[%c0_2, %c0_3] : memref<32x256xf32, #tpu.memory_space<vmem>>, vector<32x256xf32>
    %cst = arith.constant dense<0.000000e+00> : vector<128x256xf32>
    %5 = tpu.matmul %3, %4, %cst {dimension_numbers = #tpu.dot_dimension_numbers<[1], [0], [0], [1], [0, 0, 1, 1], [], []>} : vector<128x32xf32>, vector<32x256xf32>, vector<128x256xf32> -> vector<128x256xf32>
    %c0_4 = arith.constant 0 : index
    %c0_5 = arith.constant 0 : index
    %6 = vector.load %arg5[%c0_4, %c0_5] : memref<128x1xf32, #tpu.memory_space<vmem>>, vector<128x1xf32>
    %c0_6 = arith.constant 0 : index
    %c0_7 = arith.constant 0 : index
    %7 = vector.load %arg6[%c0_6, %c0_7] : memref<1x256xf32, #tpu.memory_space<vmem>>, vector<1x256xf32>
    %8 = vector.broadcast %6 : vector<128x1xf32> to vector<128x256xf32>
    %9 = vector.broadcast %7 : vector<1x256xf32> to vector<128x256xf32>
    %10 = arith.addf %8, %9 : vector<128x256xf32>
    %cst_8 = arith.constant 2.000000e+00 : f32
    %11 = vector.broadcast %cst_8 : f32 to vector<128x256xf32>
    %12 = arith.mulf %11, %5 : vector<128x256xf32>
    %13 = arith.subf %10, %12 : vector<128x256xf32>
    %cst_9 = arith.constant 0.000000e+00 : f32
    %14 = vector.broadcast %cst_9 : f32 to vector<128x256xf32>
    %15 = arith.maximumf %13, %14 : vector<128x256xf32>
    %16 = math.sqrt %15 : vector<128x256xf32>
    %c0_10 = arith.constant 0 : index
    %c0_11 = arith.constant 0 : index
    %17 = vector.load %arg2[%c0_10, %c0_11] : memref<128x256xf32, #tpu.memory_space<vmem>>, vector<128x256xf32>
    %18 = arith.subf %17, %16 : vector<128x256xf32>
    %19 = math.absf %18 : vector<128x256xf32>
    %20 = vector.extract_strided_slice %19 {offsets = [0, 0], sizes = [128, 128], strides = [1, 1]} : vector<128x256xf32> to vector<128x128xf32>
    %21 = vector.extract_strided_slice %19 {offsets = [0, 128], sizes = [128, 128], strides = [1, 1]} : vector<128x256xf32> to vector<128x128xf32>
    %22 = arith.addf %20, %21 : vector<128x128xf32>
    %c0_12 = arith.constant 0 : index
    %c0_13 = arith.constant 0 : index
    %23 = vector.load %arg8[%c0_12, %c0_13] : memref<128x128xf32, #tpu.memory_space<vmem>>, vector<128x128xf32>
    %24 = arith.addf %23, %22 : vector<128x128xf32>
    %c0_14 = arith.constant 0 : index
    %c0_15 = arith.constant 0 : index
    %25 = vector.load %arg8[%c0_14, %c0_15] : memref<128x128xf32, #tpu.memory_space<vmem>>, vector<128x128xf32>
    tpu.vector_store %arg8[%c0_14, %c0_15], %24 {strides = array<i32>} : memref<128x128xf32, #tpu.memory_space<vmem>>, vector<128x128xf32>,
    %c1_i32 = arith.constant 1 : i32
    %26 = arith.cmpi eq, %arg1, %c1_i32 : i32
    %27 = arith.extui %26 : i1 to i32
    %c0_i32_16 = arith.constant 0 : i32
    %28 = arith.cmpi ne, %27, %c0_i32_16 : i32
    scf.if %28 {
      %c0_17 = arith.constant 0 : index
      %c0_18 = arith.constant 0 : index
      %29 = vector.load %arg8[%c0_17, %c0_18] : memref<128x128xf32, #tpu.memory_space<vmem>>, vector<128x128xf32>
      %cst_19 = arith.constant dense<0.000000e+00> : vector<128xf32>
      %30 = vector.multi_reduction <add>, %29, %cst_19 [1] : vector<128x128xf32> to vector<128xf32>
      %31 = vector.shape_cast %30 : vector<128xf32> to vector<128x1xf32>
      %c0_20 = arith.constant 0 : index
      %c0_21 = arith.constant 0 : index
      %32 = vector.load %arg7[%c0_20, %c0_21] : memref<128x1xf32, #tpu.memory_space<vmem>>, vector<128x1xf32>
      tpu.vector_store %arg7[%c0_20, %c0_21], %31 {strides = array<i32>} : memref<128x1xf32, #tpu.memory_space<vmem>>, vector<128x1xf32>,
    } else {
    }
    return
  }
  func.func @transform_0(%arg0: i32, %arg1: i32) -> (i32, i32) {
    %c0_i32 = arith.constant 0 : i32
    return %arg0, %arg1 : i32, i32
  }
  func.func @transform_1(%arg0: i32, %arg1: i32) -> (i32, i32) {
    %c0_i32 = arith.constant 0 : i32
    %c0_i32_0 = arith.constant 0 : i32
    return %arg0, %c0_i32 : i32, i32
  }
  func.func @transform_2(%arg0: i32, %arg1: i32) -> (i32, i32) {
    %c0_i32 = arith.constant 0 : i32
    %c0_i32_0 = arith.constant 0 : i32
    return %c0_i32, %arg1 : i32, i32
  }
  func.func @transform_3(%arg0: i32, %arg1: i32) -> (i32, i32) {
    %c0_i32 = arith.constant 0 : i32
    %c0_i32_0 = arith.constant 0 : i32
    return %arg0, %c0_i32 : i32, i32
  }
  func.func @transform_4(%arg0: i32, %arg1: i32) -> (i32, i32) {
    %c0_i32 = arith.constant 0 : i32
    %c0_i32_0 = arith.constant 0 : i32
    return %c0_i32, %arg1 : i32, i32
  }
  func.func @transform_5(%arg0: i32, %arg1: i32) -> (i32, i32) {
    %c0_i32 = arith.constant 0 : i32
    %c0_i32_0 = arith.constant 0 : i32
    return %arg0, %c0_i32 : i32, i32
  }
}

</mosaic_0001>

<llo_original>
// kernel: tpu_custom_call.1
$region0: #{tpu_custom_call.1}
  #allocation0 [shape = 'u32[]', space=smem, size = 0x4, offset = 0x4, fixed_abs, tag = 'smem constant byte address 0x4 - core index']
  #allocation1 [shape = 'u32[72,128]{1,0:T(1,128)}', space=vmem, size = 0x9000, scoped, tag = 'internal scratch']
  #allocation2 [shape = 'f32[128,128]{1,0:T(8,128)}', space=vmem, size = 0x10000, scoped, tag = 'scratch operand']
  %s0 = inlined_call_operand.hbm [shape: f32[512,512], index: 0, kind: input, shape index: {}]
  %s1 = inlined_call_operand.vmem [shape: f32[512,32], index: 1, kind: input, shape index: {}]
  %s2 = inlined_call_operand.vmem [shape: f32[32,512], index: 2, kind: input, shape index: {}]
  %s3 = inlined_call_operand.vmem [shape: f32[512,1], index: 3, kind: input, shape index: {}]
  %s4 = inlined_call_operand.vmem [shape: f32[1,512], index: 4, kind: input, shape index: {}]
  %s5 = inlined_call_operand.vmem [shape: f32[512,1], index: 5, kind: output, shape index: {}]
  %s6 = sld [smem:[#allocation0]]
  $region88: #{tpu_custom_call.1} parent=0
    _
  %s8 = ssub.s32 1, %s6
  %s9 = scalar_select 0, %s8, %s6
  $region1: #{tpu_custom_call.1} parent=0
    #allocation3 [shape = 'u8[262144]{0}', space=vmem, size = 0x40000, scoped, tag = 'input window, operand 0']
    #allocation4 [shape = 's32[2]{0}', space=sflag, size = 0x8, scoped, tag = 'scoped memory for tpu_custom_call.1']
    #allocation5 [shape = 'u8[65536]{0}', space=vmem, size = 0x10000, scoped, tag = 'input window, operand 2']
    %10 = vsyncpa [#allocation4], 0
    %s11 = scalar_lea.sflag [#allocation4], 1
    %12 = vsyncpa %s11, 0
    loop: start=0, step=1, limit=10
    $region2: #{tpu_custom_call.1} parent=1 // loop_pre_header
      _
    $region3: #{tpu_custom_call.1} parent=1 // loop_header
      %s14 = sphi 0, %s18
      %p15 = scmp.ge.s32.totalorder %s14, 10
      %s21 = sphi 0, %s33
      %s22 = sphi 0, %s29
      %s23 = sphi 0, %s21
      %s24 = sphi 0, %s22
      %s25 = sphi 0, %s23
      %s26 = sphi 0, %s24
      %s38 = sphi 0, %s40
      %s41 = sphi 0, %s38
      %s42 = sphi 0, %s41
      %s58 = sphi 0, %s42
      %s64 = sphi 0, %s66
      %s67 = sphi 0, %s64
      %s68 = sphi 0, %s67
      %s84 = sphi 0, %s68
      %s90 = sphi 0, %s92
      %s93 = sphi 0, %s90
      %s94 = sphi 0, %s93
      %s110 = sphi 0, %s94
      %s116 = sphi 0, %s118
      %s119 = sphi 0, %s116
      %s120 = sphi 0, %s119
      %s136 = sphi 0, %s120
      %s142 = sphi 0, %s144
      %s145 = sphi 0, %s142
      %s146 = sphi 0, %s145
      %s162 = sphi 0, %s146
      %s168 = sphi 0, %s170
      %s171 = sphi 0, %s168
      %s172 = sphi 0, %s171
      %s188 = sphi 0, %s172
    $region4: #{tpu_custom_call.1} parent=1 // loop_header_branch
      %17 = sbr.rel (%p15) target = $region8
    $region5: #{tpu_custom_call.1} parent=1 // loop_body
      %s19 = ssub.s32 %s14, 1
      %s20 = ssub.s32 %s14, 2
      %s27 = sadd.s32 1, %s22
      %p28 = scmp.ge.s32.totalorder %s27, 2
      %s29 = scalar_select %p28, 0, %s27
      %s30 = sadd.s32 1, %s21
      %s31 = scalar_select %p28, %s30, %s21
      %p32 = scmp.ge.s32.totalorder %s31, 4
      %s33 = scalar_select %p32, 0, %s31
      %s34 = ssub.s32 %s21, %s33
      %s35 = ssub.s32 %s22, %s29
      %s36 = sor.u32 %s34, %s35
      %p37 = scmp.eq.s32.totalorder %s36, 0
      %s39 = sadd.s32 %s38, 1
      %s40 = scalar_select %p37, %s38, %s39
      %p43 = pneg %p37
      %p44 = scmp.eq.s32.totalorder %s14, 7
      %p45 = por %p43, %p44
      %p46 = scmp.ne.s32.totalorder %s38, %s41
      %p47 = scmp.eq.s32.totalorder %s14, 0
      %p48 = por %p46, %p47
      %p49 = scmp.ne.s32.totalorder %s38, %s41
      %p50 = scmp.eq.s32.totalorder %s19, 7
      %p51 = por %p49, %p50
      %p52 = scmp.ne.s32.totalorder %s41, %s42
      %p53 = scmp.eq.s32.totalorder %s19, 0
      %p54 = por %p52, %p53
      %p55 = scmp.ne.s32.totalorder %s41, %s42
      %p56 = scmp.eq.s32.totalorder %s20, 7
      %p57 = por %p55, %p56
      %p59 = scmp.ne.s32.totalorder %s42, %s58
      %p60 = scmp.eq.s32.totalorder %s20, 0
      %p61 = por %p59, %p60
      %s62 = ssub.s32 %s21, %s33
      %p63 = scmp.eq.s32.totalorder %s62, 0
      %s65 = sadd.s32 %s64, 1
      %s66 = scalar_select %p63, %s64, %s65
      %p69 = pneg %p63
      %p70 = scmp.eq.s32.totalorder %s14, 7
      %p71 = por %p69, %p70
      %p72 = scmp.ne.s32.totalorder %s64, %s67
      %p73 = scmp.eq.s32.totalorder %s14, 0
      %p74 = por %p72, %p73
      %p75 = scmp.ne.s32.totalorder %s64, %s67
      %p76 = scmp.eq.s32.totalorder %s19, 7
      %p77 = por %p75, %p76
      %p78 = scmp.ne.s32.totalorder %s67, %s68
      %p79 = scmp.eq.s32.totalorder %s19, 0
      %p80 = por %p78, %p79
      %p81 = scmp.ne.s32.totalorder %s67, %s68
      %p82 = scmp.eq.s32.totalorder %s20, 7
      %p83 = por %p81, %p82
      %p85 = scmp.ne.s32.totalorder %s68, %s84
      %p86 = scmp.eq.s32.totalorder %s20, 0
      %p87 = por %p85, %p86
      %s88 = ssub.s32 %s22, %s29
      %p89 = scmp.eq.s32.totalorder %s88, 0
      %s91 = sadd.s32 %s90, 1
      %s92 = scalar_select %p89, %s90, %s91
      %p95 = pneg %p89
      %p96 = scmp.eq.s32.totalorder %s14, 7
      %p97 = por %p95, %p96
      %p98 = scmp.ne.s32.totalorder %s90, %s93
      %p99 = scmp.eq.s32.totalorder %s14, 0
      %p100 = por %p98, %p99
      %p101 = scmp.ne.s32.totalorder %s90, %s93
      %p102 = scmp.eq.s32.totalorder %s19, 7
      %p103 = por %p101, %p102
      %p104 = scmp.ne.s32.totalorder %s93, %s94
      %p105 = scmp.eq.s32.totalorder %s19, 0
      %p106 = por %p104, %p105
      %p107 = scmp.ne.s32.totalorder %s93, %s94
      %p108 = scmp.eq.s32.totalorder %s20, 7
      %p109 = por %p107, %p108
      %p111 = scmp.ne.s32.totalorder %s94, %s110
      %p112 = scmp.eq.s32.totalorder %s20, 0
      %p113 = por %p111, %p112
      %s114 = ssub.s32 %s21, %s33
      %p115 = scmp.eq.s32.totalorder %s114, 0
      %s117 = sadd.s32 %s116, 1
      %s118 = scalar_select %p115, %s116, %s117
      %p121 = pneg %p115
      %p122 = scmp.eq.s32.totalorder %s14, 7
      %p123 = por %p121, %p122
      %p124 = scmp.ne.s32.totalorder %s116, %s119
      %p125 = scmp.eq.s32.totalorder %s14, 0
      %p126 = por %p124, %p125
      %p127 = scmp.ne.s32.totalorder %s116, %s119
      %p128 = scmp.eq.s32.totalorder %s19, 7
      %p129 = por %p127, %p128
      %p130 = scmp.ne.s32.totalorder %s119, %s120
      %p131 = scmp.eq.s32.totalorder %s19, 0
      %p132 = por %p130, %p131
      %p133 = scmp.ne.s32.totalorder %s119, %s120
      %p134 = scmp.eq.s32.totalorder %s20, 7
      %p135 = por %p133, %p134
      %p137 = scmp.ne.s32.totalorder %s120, %s136
      %p138 = scmp.eq.s32.totalorder %s20, 0
      %p139 = por %p137, %p138
      %s140 = ssub.s32 %s22, %s29
      %p141 = scmp.eq.s32.totalorder %s140, 0
      %s143 = sadd.s32 %s142, 1
      %s144 = scalar_select %p141, %s142, %s143
      %p147 = pneg %p141
      %p148 = scmp.eq.s32.totalorder %s14, 7
      %p149 = por %p147, %p148
      %p150 = scmp.ne.s32.totalorder %s142, %s145
      %p151 = scmp.eq.s32.totalorder %s14, 0
      %p152 = por %p150, %p151
      %p153 = scmp.ne.s32.totalorder %s142, %s145
      %p154 = scmp.eq.s32.totalorder %s19, 7
      %p155 = por %p153, %p154
      %p156 = scmp.ne.s32.totalorder %s145, %s146
      %p157 = scmp.eq.s32.totalorder %s19, 0
      %p158 = por %p156, %p157
      %p159 = scmp.ne.s32.totalorder %s145, %s146
      %p160 = scmp.eq.s32.totalorder %s20, 7
      %p161 = por %p159, %p160
      %p163 = scmp.ne.s32.totalorder %s146, %s162
      %p164 = scmp.eq.s32.totalorder %s20, 0
      %p165 = por %p163, %p164
      %s166 = ssub.s32 %s21, %s33
      %p167 = scmp.eq.s32.totalorder %s166, 0
      %s169 = sadd.s32 %s168, 1
      %s170 = scalar_select %p167, %s168, %s169
      %p173 = pneg %p167
      %p174 = scmp.eq.s32.totalorder %s14, 7
      %p175 = por %p173, %p174
      %p176 = scmp.ne.s32.totalorder %s168, %s171
      %p177 = scmp.eq.s32.totalorder %s14, 0
      %p178 = por %p176, %p177
      %p179 = scmp.ne.s32.totalorder %s168, %s171
      %p180 = scmp.eq.s32.totalorder %s19, 7
      %p181 = por %p179, %p180
      %p182 = scmp.ne.s32.totalorder %s171, %s172
      %p183 = scmp.eq.s32.totalorder %s19, 0
      %p184 = por %p182, %p183
      %p185 = scmp.ne.s32.totalorder %s171, %s172
      %p186 = scmp.eq.s32.totalorder %s20, 7
      %p187 = por %p185, %p186
      %p189 = scmp.ne.s32.totalorder %s172, %s188
      %p190 = scmp.eq.s32.totalorder %s20, 0
      %p191 = por %p189, %p190
      %p192 = scmp.le.s32.totalorder 1, %s14
      %p193 = scmp.lt.s32.totalorder %s14, 9
      %p194 = pnand %p192, %p193
      %p195 = pneg %p194
      // Predicated region
      $region9: #{tpu_custom_call.1} parent=5 // pred_check
        _
      $region10: #{tpu_custom_call.1} parent=5 // pred_check_branch
        %197 = sbr.rel (%p194) target = $region12
      $region11: #{tpu_custom_call.1} parent=5 // pred_region
        %s198 = ssub.s32 %s14, 1
      $region12: #{tpu_custom_call.1} parent=5 // pred_fallthru
        _
      %p199 = scmp.lt.s32.totalorder %s14, 8
      // Predicated region
      $region13: #{tpu_custom_call.1} parent=5 // pred_check
        %p200 = pneg %p199
      $region14: #{tpu_custom_call.1} parent=5 // pred_check_branch
        %202 = sbr.rel (%p200) target = $region16
      $region15: #{tpu_custom_call.1} parent=5 // pred_region
        // Predicated region
        $region17: #{tpu_custom_call.1} parent=15 // pred_check
          %p203 = pneg %p48
        $region18: #{tpu_custom_call.1} parent=15 // pred_check_branch
          %205 = sbr.rel (%p203) target = $region20
        $region19: #{tpu_custom_call.1} parent=15 // pred_region
          %s206 = sand.u32 %s38, 1
          %s207 = scalar_lea.sflag [#allocation4], %s206
          %s208 = sand.u32 %s38, 1
          %s209 = smul.addr %s208, 256
          %s210 = scalar_lea.vmem [#allocation3], %s209
          %s211 = smul.u32 16, %s21
          %s212 = smul.u32 2, %s22
          %214 = vsyncadd %s207, 0
          %s215 = smul.addr %s211, 4
          %s216 = sadd.s32 %s212, %s215
          %s217 = smul.addr %s216, 8
          %s218 = scalar_lea.hbm %s0, %s217
          %s219 = sshll.u32 %s218, 4
          %s220 = int_to_ptr.hbm [resolvable:$true] %s219
          %s221 = sshll.u32 %s210, 4
          %s222 = int_to_ptr.vmem [resolvable:$true] %s221
          %227 = dma.hbm_to_vmem [thread:$0]  %s220, 4096, %s222, %s207, 512, 256, 16
        $region20: #{tpu_custom_call.1} parent=15 // pred_fallthru
          _
        // Predicated region
        $region21: #{tpu_custom_call.1} parent=15 // pred_check
          %p228 = pneg %p74
        $region22: #{tpu_custom_call.1} parent=15 // pred_check_branch
          %230 = sbr.rel (%p228) target = $region24
        $region23: #{tpu_custom_call.1} parent=15 // pred_region
          %s231 = smul.u32 16, %s21
          %p232 = scmp.lt.s32.totalorder %s231, 63
          %s233 = scalar_select %p232, %s231, 63
          %s234 = smul.addr %s233, 8
          %s235 = scalar_lea.vmem %s1, %s234
          %s236 = smul.u32 16, %s21
        $region24: #{tpu_custom_call.1} parent=15 // pred_fallthru
          _
        // Predicated region
        $region25: #{tpu_custom_call.1} parent=15 // pred_check
          %p237 = pneg %p100
        $region26: #{tpu_custom_call.1} parent=15 // pred_check_branch
          %239 = sbr.rel (%p237) target = $region28
        $region27: #{tpu_custom_call.1} parent=15 // pred_region
          %s240 = sand.u32 %s90, 1
          %s241 = sand.u32 %s90, 1
          %s242 = smul.addr %s241, 64
          %s243 = scalar_lea.vmem [#allocation5], %s242
          %s244 = smul.u32 2, %s22
          %s245 = smul.addr %s244, 8
          %s246 = scalar_lea.vmem %s2, %s245
          // Predicated region
          $region29: #{tpu_custom_call.1} parent=27 // pred_check
            _
          $region30: #{tpu_custom_call.1} parent=27 // pred_check_branch
            %248 = sbr.rel (0) target = $region32
          $region31: #{tpu_custom_call.1} parent=27 // pred_region
            // Predicated region
            $region33: #{tpu_custom_call.1} parent=31 // pred_check
              _
            $region34: #{tpu_custom_call.1} parent=31 // pred_check_branch
              %250 = sbr.rel (0) target = $region36
            $region35: #{tpu_custom_call.1} parent=31 // pred_region
              loop: start=0, step=1, limit=1
              $region37: #{tpu_custom_call.1} parent=35 // loop_pre_header
                _
              $region38: #{tpu_custom_call.1} parent=35 // loop_header
                %s252 = sphi 0, %s256
                %p253 = scmp.ge.s32.totalorder %s252, 1
                %s257 = sphi %s246, %s246
                %s258 = sphi %s243, %s243
              $region39: #{tpu_custom_call.1} parent=35 // loop_header_branch
                %255 = sbr.rel (%p253) target = $region43
              $region40: #{tpu_custom_call.1} parent=35 // loop_body
                %v259 = vld [vmem:[%s257] sm:$0xff]
                %260 = vst [vmem:[%s258] sm:$0xff] %v259
                %v261 = vld [vmem:[%s257 + $0x8] sm:$0xff]
                %262 = vst [vmem:[%s258 + $0x8] sm:$0xff] %v261
                %v263 = vld [vmem:[%s257 + $0x20] sm:$0xff]
                %264 = vst [vmem:[%s258 + $0x10] sm:$0xff] %v263
                %v265 = vld [vmem:[%s257 + $0x28] sm:$0xff]
                %266 = vst [vmem:[%s258 + $0x18] sm:$0xff] %v265
                %v267 = vld [vmem:[%s257 + $0x40] sm:$0xff]
                %268 = vst [vmem:[%s258 + $0x20] sm:$0xff] %v267
                %v269 = vld [vmem:[%s257 + $0x48] sm:$0xff]
                %270 = vst [vmem:[%s258 + $0x28] sm:$0xff] %v269
                %v271 = vld [vmem:[%s257 + $0x60] sm:$0xff]
                %272 = vst [vmem:[%s258 + $0x30] sm:$0xff] %v271
                %v273 = vld [vmem:[%s257 + $0x68] sm:$0xff]
                %274 = vst [vmem:[%s258 + $0x38] sm:$0xff] %v273
              $region41: #{tpu_custom_call.1} parent=35 // loop_footer
                %s256 = sadd.s32 1, %s252
              $region42: #{tpu_custom_call.1} parent=35 // loop_footer_branch
                %251 = sbr.rel target = $region38
              $region43: #{tpu_custom_call.1} parent=35 // loop_exit
                _
            $region36: #{tpu_custom_call.1} parent=31 // pred_fallthru
              _
            // Predicated region
            $region44: #{tpu_custom_call.1} parent=31 // pred_check
              _
            $region45: #{tpu_custom_call.1} parent=31 // pred_check_branch
              %276 = sbr.rel target = $region47
            $region46: #{tpu_custom_call.1} parent=31 // pred_region
              _
            $region47: #{tpu_custom_call.1} parent=31 // pred_fallthru
              _
          $region32: #{tpu_custom_call.1} parent=27 // pred_fallthru
            _
          %277 = vnop
        $region28: #{tpu_custom_call.1} parent=15 // pred_fallthru
          _
        // Predicated region
        $region48: #{tpu_custom_call.1} parent=15 // pred_check
          %p278 = pneg %p126
        $region49: #{tpu_custom_call.1} parent=15 // pred_check_branch
          %280 = sbr.rel (%p278) target = $region51
        $region50: #{tpu_custom_call.1} parent=15 // pred_region
          %s281 = smul.u32 16, %s21
          %p282 = scmp.lt.s32.totalorder %s281, 63
          %s283 = scalar_select %p282, %s281, 63
          %s284 = smul.addr %s283, 8
          %s285 = scalar_lea.vmem %s3, %s284
          %s286 = smul.u32 16, %s21
        $region51: #{tpu_custom_call.1} parent=15 // pred_fallthru
          _
        // Predicated region
        $region52: #{tpu_custom_call.1} parent=15 // pred_check
          %p287 = pneg %p152
        $region53: #{tpu_custom_call.1} parent=15 // pred_check_branch
          %289 = sbr.rel (%p287) target = $region55
        $region54: #{tpu_custom_call.1} parent=15 // pred_region
          %s290 = smul.u32 2, %s22
          %p291 = scmp.lt.s32.totalorder %s290, 3
          %s292 = scalar_select %p291, %s290, 3
          %s293 = scalar_lea.vmem %s4, %s292
          %s294 = smul.u32 2, %s22
        $region55: #{tpu_custom_call.1} parent=15 // pred_fallthru
          _
      $region16: #{tpu_custom_call.1} parent=5 // pred_fallthru
        _
      %p295 = scmp.le.s32.totalorder 1, %s14
      %p296 = scmp.lt.s32.totalorder %s14, 9
      %p297 = pnand %p295, %p296
      %p298 = pneg %p297
      // Predicated region
      $region56: #{tpu_custom_call.1} parent=5 // pred_check
        _
      $region57: #{tpu_custom_call.1} parent=5 // pred_check_branch
        %300 = sbr.rel (%p297) target = $region59
      $region58: #{tpu_custom_call.1} parent=5 // pred_region
        %s301 = ssub.s32 %s14, 1
        %s302 = sand.u32 %s41, 1
        %s303 = scalar_lea.sflag [#allocation4], %s302
        %s304 = sand.u32 %s41, 1
        %s305 = smul.addr %s304, 256
        %s306 = scalar_lea.vmem [#allocation3], %s305
        // Predicated region
        $region60: #{tpu_custom_call.1} parent=58 // pred_check
          %p307 = pneg %p54
        $region61: #{tpu_custom_call.1} parent=58 // pred_check_branch
          %309 = sbr.rel (%p307) target = $region63
        $region62: #{tpu_custom_call.1} parent=58 // pred_region
          %311 = dma.done %s303, 4096
        $region63: #{tpu_custom_call.1} parent=58 // pred_fallthru
          _
        %s312 = sand.u32 %s93, 1
        %s313 = sand.u32 %s93, 1
        %s314 = smul.addr %s313, 64
        %s315 = scalar_lea.vmem [#allocation5], %s314
        // Predicated region
        $region64: #{tpu_custom_call.1} parent=58 // pred_check
          %p316 = pneg %p106
        $region65: #{tpu_custom_call.1} parent=58 // pred_check_branch
          %318 = sbr.rel (%p316) target = $region67
        $region66: #{tpu_custom_call.1} parent=58 // pred_region
          _
        $region67: #{tpu_custom_call.1} parent=58 // pred_fallthru
          _
        %s319 = sand.u32 %s41, 1
        %s320 = scalar_lea.sflag [#allocation4], %s319
        %s321 = sand.u32 %s41, 1
        %s322 = smul.addr %s321, 256
        %s323 = scalar_lea.vmem [#allocation3], %s322
        %p324 = pneg %p54
        %p325 = pneg %p51
        %s326 = smul.u32 16, %s23
        %p327 = scmp.lt.s32.totalorder %s326, 63
        %s328 = scalar_select %p327, %s326, 63
        %s329 = smul.addr %s328, 8
        %s330 = scalar_lea.vmem %s1, %s329
        %p331 = pneg %p80
        %p332 = pneg %p77
        %s333 = sand.u32 %s93, 1
        %s334 = sand.u32 %s93, 1
        %s335 = smul.addr %s334, 64
        %s336 = scalar_lea.vmem [#allocation5], %s335
        %p337 = pneg %p106
        %p338 = pneg %p103
        %s339 = smul.u32 16, %s23
        %p340 = scmp.lt.s32.totalorder %s339, 63
        %s341 = scalar_select %p340, %s339, 63
        %s342 = smul.addr %s341, 8
        %s343 = scalar_lea.vmem %s3, %s342
        %p344 = pneg %p132
        %p345 = pneg %p129
        %s346 = smul.u32 2, %s24
        %p347 = scmp.lt.s32.totalorder %s346, 3
        %s348 = scalar_select %p347, %s346, 3
        %s349 = scalar_lea.vmem %s4, %s348
        %p350 = pneg %p158
        %p351 = pneg %p155
        %p352 = pneg %p184
        %p353 = pneg %p181
        %s354 = smul.u32 16, %s23
        %p355 = scmp.lt.s32.totalorder %s354, 63
        %s356 = scalar_select %p355, %s354, 63
        %s357 = smul.addr %s356, 8
        %s358 = scalar_lea.vmem %s5, %s357
        %s359 = smul.u32 16, %s23
        %s360 = smul.u32 2, %s24
        %s361 = smul.u32 16, %s23
        %p362 = scmp.lt.s32.totalorder %s361, 63
        %s363 = scalar_select %p362, %s361, 63
        %s364 = smul.addr %s363, 8
        %s365 = scalar_lea.vmem %s1, %s364
        %s366 = smul.u32 16, %s23
        %s367 = smul.u32 2, %s24
        %s368 = smul.u32 16, %s23
        %p369 = scmp.lt.s32.totalorder %s368, 63
        %s370 = scalar_select %p369, %s368, 63
        %s371 = smul.addr %s370, 8
        %s372 = scalar_lea.vmem %s3, %s371
        %s373 = smul.u32 16, %s23
        %s374 = smul.u32 2, %s24
        %p375 = scmp.lt.s32.totalorder %s374, 3
        %s376 = scalar_select %p375, %s374, 3
        %s377 = scalar_lea.vmem %s4, %s376
        %s378 = smul.u32 2, %s24
        %s379 = smul.u32 16, %s23
        %p380 = scmp.lt.s32.totalorder %s379, 63
        %s381 = scalar_select %p380, %s379, 63
        %s382 = smul.addr %s381, 8
        %s383 = scalar_lea.vmem %s5, %s382
        %s384 = smul.u32 16, %s23
        %p385 = scmp.eq.s32.totalorder %s24, 0
        // Predicated region
        $region68: #{tpu_custom_call.1} parent=58 // pred_check
          %p386 = pneg %p385
        $region69: #{tpu_custom_call.1} parent=58 // pred_check_branch
          %388 = sbr.rel (%p386) target = $region71
        $region70: #{tpu_custom_call.1} parent=58 // pred_region
          %389 = vst [vmem:[#allocation2] sm:$0xff] 0.0
          %390 = vst [vmem:[#allocation2 + $0x8] sm:$0xff] 0.0
          %391 = vst [vmem:[#allocation2 + $0x10] sm:$0xff] 0.0
          %392 = vst [vmem:[#allocation2 + $0x18] sm:$0xff] 0.0
          %393 = vst [vmem:[#allocation2 + $0x20] sm:$0xff] 0.0
          %394 = vst [vmem:[#allocation2 + $0x28] sm:$0xff] 0.0
          %395 = vst [vmem:[#allocation2 + $0x30] sm:$0xff] 0.0
          %396 = vst [vmem:[#allocation2 + $0x38] sm:$0xff] 0.0
          %397 = vst [vmem:[#allocation2 + $0x40] sm:$0xff] 0.0
          %398 = vst [vmem:[#allocation2 + $0x48] sm:$0xff] 0.0
          %399 = vst [vmem:[#allocation2 + $0x50] sm:$0xff] 0.0
          %400 = vst [vmem:[#allocation2 + $0x58] sm:$0xff] 0.0
          %401 = vst [vmem:[#allocation2 + $0x60] sm:$0xff] 0.0
          %402 = vst [vmem:[#allocation2 + $0x68] sm:$0xff] 0.0
          %403 = vst [vmem:[#allocation2 + $0x70] sm:$0xff] 0.0
          %404 = vst [vmem:[#allocation2 + $0x78] sm:$0xff] 0.0
        $region71: #{tpu_custom_call.1} parent=58 // pred_fallthru
          _
        %v405 = vld [vmem:[%s365] sm:$0xff]
        %v406 = vld [vmem:[%s365 + $0x8] sm:$0xff]
        %v407 = vld [vmem:[%s365 + $0x10] sm:$0xff]
        %v408 = vld [vmem:[%s365 + $0x18] sm:$0xff]
        %v409 = vld [vmem:[%s365 + $0x20] sm:$0xff]
        %v410 = vld [vmem:[%s365 + $0x28] sm:$0xff]
        %v411 = vld [vmem:[%s365 + $0x30] sm:$0xff]
        %v412 = vld [vmem:[%s365 + $0x38] sm:$0xff]
        %v413 = vld [vmem:[%s365 + $0x40] sm:$0xff]
        %v414 = vld [vmem:[%s365 + $0x48] sm:$0xff]
        %v415 = vld [vmem:[%s365 + $0x50] sm:$0xff]
        %v416 = vld [vmem:[%s365 + $0x58] sm:$0xff]
        %v417 = vld [vmem:[%s365 + $0x60] sm:$0xff]
        %v418 = vld [vmem:[%s365 + $0x68] sm:$0xff]
        %v419 = vld [vmem:[%s365 + $0x70] sm:$0xff]
        %v420 = vld [vmem:[%s365 + $0x78] sm:$0xff]
        %v421 = vld [vmem:[%s315] sm:$0xff]
        %v422 = vld [vmem:[%s315 + $0x8] sm:$0xff]
        %v423 = vld [vmem:[%s315 + $0x10] sm:$0xff]
        %v424 = vld [vmem:[%s315 + $0x18] sm:$0xff]
        %v425 = vld [vmem:[%s315 + $0x20] sm:$0xff]
        %v426 = vld [vmem:[%s315 + $0x28] sm:$0xff]
        %v427 = vld [vmem:[%s315 + $0x30] sm:$0xff]
        %v428 = vld [vmem:[%s315 + $0x38] sm:$0xff]
        %vm429 = vcmask 261120
        %v431 = vsel %vm429, %v405, 0
        %v434 = vsel %vm429, %v406, 0
        %v437 = vsel %vm429, %v407, 0
        %v440 = vsel %vm429, %v408, 0
        %v443 = vsel %vm429, %v409, 0
        %v446 = vsel %vm429, %v410, 0
        %v449 = vsel %vm429, %v411, 0
        %v452 = vsel %vm429, %v412, 0
        %v455 = vsel %vm429, %v413, 0
        %v458 = vsel %vm429, %v414, 0
        %v461 = vsel %vm429, %v415, 0
        %v464 = vsel %vm429, %v416, 0
        %v467 = vsel %vm429, %v417, 0
        %v470 = vsel %vm429, %v418, 0
        %v473 = vsel %vm429, %v419, 0
        %v476 = vsel %vm429, %v420, 0
        %478 = vmatpush.msra.mxu0 0.0
        %479 = vmatpush.msra.mxu0 0.0
        %480 = vmatpush.msra.mxu0 0.0
        %481 = vmatpush.msra.mxu0 0.0
        %482 = vmatpush.msra.mxu0 0.0
        %483 = vmatpush.msra.mxu0 0.0
        %484 = vmatpush.msra.mxu0 0.0
        %485 = vmatpush.msra.mxu0 0.0
        %486 = vmatpush.msra.mxu0 0.0
        %487 = vmatpush.msra.mxu0 0.0
        %488 = vmatpush.msra.mxu0 0.0
        %489 = vmatpush.msra.mxu0 0.0
        %490 = vmatpush.msra.mxu0 %v427
        %491 = vmatpush.msra.mxu0 %v425
        %492 = vmatpush.msra.mxu0 %v423
        %493 = vmatpush.msra.mxu0 %v421
        %494 = vmatmul.f32.gmra.mxu0 %v431
        %v495 = vpop.f32.mrf.mxu0
        %v496 = vadd.f32 0.0, %v495
        %497 = vmatmul.f32.gmra.mxu0 %v434
        %v498 = vpop.f32.mrf.mxu0
        %v499 = vadd.f32 0.0, %v498
        %500 = vmatmul.f32.gmra.mxu0 %v437
        %v501 = vpop.f32.mrf.mxu0
        %v502 = vadd.f32 0.0, %v501
        %503 = vmatmul.f32.gmra.mxu0 %v440
        %v504 = vpop.f32.mrf.mxu0
        %v505 = vadd.f32 0.0, %v504
        %506 = vmatmul.f32.gmra.mxu0 %v443
        %v507 = vpop.f32.mrf.mxu0
        %v508 = vadd.f32 0.0, %v507
        %509 = vmatmul.f32.gmra.mxu0 %v446
        %v510 = vpop.f32.mrf.mxu0
        %v511 = vadd.f32 0.0, %v510
        %512 = vmatmul.f32.gmra.mxu0 %v449
        %v513 = vpop.f32.mrf.mxu0
        %v514 = vadd.f32 0.0, %v513
        %515 = vmatmul.f32.gmra.mxu0 %v452
        %v516 = vpop.f32.mrf.mxu0
        %v517 = vadd.f32 0.0, %v516
        %518 = vmatmul.f32.gmra.mxu0 %v455
        %v519 = vpop.f32.mrf.mxu0
        %v520 = vadd.f32 0.0, %v519
        %521 = vmatmul.f32.gmra.mxu0 %v458
        %v522 = vpop.f32.mrf.mxu0
        %v523 = vadd.f32 0.0, %v522
        %524 = vmatmul.f32.gmra.mxu0 %v461
        %v525 = vpop.f32.mrf.mxu0
        %v526 = vadd.f32 0.0, %v525
        %527 = vmatmul.f32.gmra.mxu0 %v464
        %v528 = vpop.f32.mrf.mxu0
        %v529 = vadd.f32 0.0, %v528
        %530 = vmatmul.f32.gmra.mxu0 %v467
        %v531 = vpop.f32.mrf.mxu0
        %v532 = vadd.f32 0.0, %v531
        %533 = vmatmul.f32.gmra.mxu0 %v470
        %v534 = vpop.f32.mrf.mxu0
        %v535 = vadd.f32 0.0, %v534
        %536 = vmatmul.f32.gmra.mxu0 %v473
        %v537 = vpop.f32.mrf.mxu0
        %v538 = vadd.f32 0.0, %v537
        %539 = vmatmul.f32.gmra.mxu0 %v476
        %v540 = vpop.f32.mrf.mxu0
        %v541 = vadd.f32 0.0, %v540
        %542 = vdwg.mxu0
        %543 = vmatpush.msra.mxu0 0.0
        %544 = vmatpush.msra.mxu0 0.0
        %545 = vmatpush.msra.mxu0 0.0
        %546 = vmatpush.msra.mxu0 0.0
        %547 = vmatpush.msra.mxu0 0.0
        %548 = vmatpush.msra.mxu0 0.0
        %549 = vmatpush.msra.mxu0 0.0
        %550 = vmatpush.msra.mxu0 0.0
        %551 = vmatpush.msra.mxu0 0.0
        %552 = vmatpush.msra.mxu0 0.0
        %553 = vmatpush.msra.mxu0 0.0
        %554 = vmatpush.msra.mxu0 0.0
        %555 = vmatpush.msra.mxu0 %v428
        %556 = vmatpush.msra.mxu0 %v426
        %557 = vmatpush.msra.mxu0 %v424
        %558 = vmatpush.msra.mxu0 %v422
        %559 = vmatmul.f32.gmra.mxu0 %v431
        %v560 = vpop.f32.mrf.mxu0
        %v561 = vadd.f32 0.0, %v560
        %562 = vmatmul.f32.gmra.mxu0 %v434
        %v563 = vpop.f32.mrf.mxu0
        %v564 = vadd.f32 0.0, %v563
        %565 = vmatmul.f32.gmra.mxu0 %v437
        %v566 = vpop.f32.mrf.mxu0
        %v567 = vadd.f32 0.0, %v566
        %568 = vmatmul.f32.gmra.mxu0 %v440
        %v569 = vpop.f32.mrf.mxu0
        %v570 = vadd.f32 0.0, %v569
        %571 = vmatmul.f32.gmra.mxu0 %v443
        %v572 = vpop.f32.mrf.mxu0
        %v573 = vadd.f32 0.0, %v572
        %574 = vmatmul.f32.gmra.mxu0 %v446
        %v575 = vpop.f32.mrf.mxu0
        %v576 = vadd.f32 0.0, %v575
        %577 = vmatmul.f32.gmra.mxu0 %v449
        %v578 = vpop.f32.mrf.mxu0
        %v579 = vadd.f32 0.0, %v578
        %580 = vmatmul.f32.gmra.mxu0 %v452
        %v581 = vpop.f32.mrf.mxu0
        %v582 = vadd.f32 0.0, %v581
        %583 = vmatmul.f32.gmra.mxu0 %v455
        %v584 = vpop.f32.mrf.mxu0
        %v585 = vadd.f32 0.0, %v584
        %586 = vmatmul.f32.gmra.mxu0 %v458
        %v587 = vpop.f32.mrf.mxu0
        %v588 = vadd.f32 0.0, %v587
        %589 = vmatmul.f32.gmra.mxu0 %v461
        %v590 = vpop.f32.mrf.mxu0
        %v591 = vadd.f32 0.0, %v590
        %592 = vmatmul.f32.gmra.mxu0 %v464
        %v593 = vpop.f32.mrf.mxu0
        %v594 = vadd.f32 0.0, %v593
        %595 = vmatmul.f32.gmra.mxu0 %v467
        %v596 = vpop.f32.mrf.mxu0
        %v597 = vadd.f32 0.0, %v596
        %598 = vmatmul.f32.gmra.mxu0 %v470
        %v599 = vpop.f32.mrf.mxu0
        %v600 = vadd.f32 0.0, %v599
        %601 = vmatmul.f32.gmra.mxu0 %v473
        %v602 = vpop.f32.mrf.mxu0
        %v603 = vadd.f32 0.0, %v602
        %604 = vmatmul.f32.gmra.mxu0 %v476
        %v605 = vpop.f32.mrf.mxu0
        %v606 = vadd.f32 0.0, %v605
        %607 = vdwg.mxu0
        %v608 = vld [vmem:[%s372] sm:$0xff]
        %v609 = vld [vmem:[%s372 + $0x8] sm:$0xff]
        %v610 = vld [vmem:[%s372 + $0x10] sm:$0xff]
        %v611 = vld [vmem:[%s372 + $0x18] sm:$0xff]
        %v612 = vld [vmem:[%s372 + $0x20] sm:$0xff]
        %v613 = vld [vmem:[%s372 + $0x28] sm:$0xff]
        %v614 = vld [vmem:[%s372 + $0x30] sm:$0xff]
        %v615 = vld [vmem:[%s372 + $0x38] sm:$0xff]
        %v616 = vld [vmem:[%s372 + $0x40] sm:$0xff]
        %v617 = vld [vmem:[%s372 + $0x48] sm:$0xff]
        %v618 = vld [vmem:[%s372 + $0x50] sm:$0xff]
        %v619 = vld [vmem:[%s372 + $0x58] sm:$0xff]
        %v620 = vld [vmem:[%s372 + $0x60] sm:$0xff]
        %v621 = vld [vmem:[%s372 + $0x68] sm:$0xff]
        %v622 = vld [vmem:[%s372 + $0x70] sm:$0xff]
        %v623 = vld [vmem:[%s372 + $0x78] sm:$0xff]
        %v624 = vld [vmem:[%s377] sm:$0x3]
        %626 = vset.pattern.permute.xlu0 0
        %627 = vperm.xlu0 %626, %v608
        %v628 = vpop.permute.xlu0 %627
        %631 = vset.pattern.permute.xlu0 0
        %632 = vperm.xlu0 %631, %v609
        %v633 = vpop.permute.xlu0 %632
        %636 = vset.pattern.permute.xlu0 0
        %637 = vperm.xlu0 %636, %v610
        %v638 = vpop.permute.xlu0 %637
        %641 = vset.pattern.permute.xlu0 0
        %642 = vperm.xlu0 %641, %v611
        %v643 = vpop.permute.xlu0 %642
        %646 = vset.pattern.permute.xlu0 0
        %647 = vperm.xlu0 %646, %v612
        %v648 = vpop.permute.xlu0 %647
        %651 = vset.pattern.permute.xlu0 0
        %652 = vperm.xlu0 %651, %v613
        %v653 = vpop.permute.xlu0 %652
        %656 = vset.pattern.permute.xlu0 0
        %657 = vperm.xlu0 %656, %v614
        %v658 = vpop.permute.xlu0 %657
        %661 = vset.pattern.permute.xlu0 0
        %662 = vperm.xlu0 %661, %v615
        %v663 = vpop.permute.xlu0 %662
        %666 = vset.pattern.permute.xlu0 0
        %667 = vperm.xlu0 %666, %v616
        %v668 = vpop.permute.xlu0 %667
        %671 = vset.pattern.permute.xlu0 0
        %672 = vperm.xlu0 %671, %v617
        %v673 = vpop.permute.xlu0 %672
        %676 = vset.pattern.permute.xlu0 0
        %677 = vperm.xlu0 %676, %v618
        %v678 = vpop.permute.xlu0 %677
        %681 = vset.pattern.permute.xlu0 0
        %682 = vperm.xlu0 %681, %v619
        %v683 = vpop.permute.xlu0 %682
        %686 = vset.pattern.permute.xlu0 0
        %687 = vperm.xlu0 %686, %v620
        %v688 = vpop.permute.xlu0 %687
        %691 = vset.pattern.permute.xlu0 0
        %692 = vperm.xlu0 %691, %v621
        %v693 = vpop.permute.xlu0 %692
        %696 = vset.pattern.permute.xlu0 0
        %697 = vperm.xlu0 %696, %v622
        %v698 = vpop.permute.xlu0 %697
        %701 = vset.pattern.permute.xlu0 0
        %702 = vperm.xlu0 %701, %v623
        %v703 = vpop.permute.xlu0 %702
        %v706 = vperm.slane %v624, 0
        %v707 = vperm.slane %v624, 1
        %v710 = vadd.f32 %v628, %v706
        %v711 = vadd.f32 %v628, %v707
        %v712 = vadd.f32 %v633, %v706
        %v713 = vadd.f32 %v633, %v707
        %v714 = vadd.f32 %v638, %v706
        %v715 = vadd.f32 %v638, %v707
        %v716 = vadd.f32 %v643, %v706
        %v717 = vadd.f32 %v643, %v707
        %v718 = vadd.f32 %v648, %v706
        %v719 = vadd.f32 %v648, %v707
        %v720 = vadd.f32 %v653, %v706
        %v721 = vadd.f32 %v653, %v707
        %v722 = vadd.f32 %v658, %v706
        %v723 = vadd.f32 %v658, %v707
        %v724 = vadd.f32 %v663, %v706
        %v725 = vadd.f32 %v663, %v707
        %v726 = vadd.f32 %v668, %v706
        %v727 = vadd.f32 %v668, %v707
        %v728 = vadd.f32 %v673, %v706
        %v729 = vadd.f32 %v673, %v707
        %v730 = vadd.f32 %v678, %v706
        %v731 = vadd.f32 %v678, %v707
        %v732 = vadd.f32 %v683, %v706
        %v733 = vadd.f32 %v683, %v707
        %v734 = vadd.f32 %v688, %v706
        %v735 = vadd.f32 %v688, %v707
        %v736 = vadd.f32 %v693, %v706
        %v737 = vadd.f32 %v693, %v707
        %v738 = vadd.f32 %v698, %v706
        %v739 = vadd.f32 %v698, %v707
        %v740 = vadd.f32 %v703, %v706
        %v741 = vadd.f32 %v703, %v707
        %v742 = vmul.f32 %v496, 2.0
        %v743 = vmul.f32 %v561, 2.0
        %v744 = vmul.f32 %v499, 2.0
        %v745 = vmul.f32 %v564, 2.0
        %v746 = vmul.f32 %v502, 2.0
        %v747 = vmul.f32 %v567, 2.0
        %v748 = vmul.f32 %v505, 2.0
        %v749 = vmul.f32 %v570, 2.0
        %v750 = vmul.f32 %v508, 2.0
        %v751 = vmul.f32 %v573, 2.0
        %v752 = vmul.f32 %v511, 2.0
        %v753 = vmul.f32 %v576, 2.0
        %v754 = vmul.f32 %v514, 2.0
        %v755 = vmul.f32 %v579, 2.0
        %v756 = vmul.f32 %v517, 2.0
        %v757 = vmul.f32 %v582, 2.0
        %v758 = vmul.f32 %v520, 2.0
        %v759 = vmul.f32 %v585, 2.0
        %v760 = vmul.f32 %v523, 2.0
        %v761 = vmul.f32 %v588, 2.0
        %v762 = vmul.f32 %v526, 2.0
        %v763 = vmul.f32 %v591, 2.0
        %v764 = vmul.f32 %v529, 2.0
        %v765 = vmul.f32 %v594, 2.0
        %v766 = vmul.f32 %v532, 2.0
        %v767 = vmul.f32 %v597, 2.0
        %v768 = vmul.f32 %v535, 2.0
        %v769 = vmul.f32 %v600, 2.0
        %v770 = vmul.f32 %v538, 2.0
        %v771 = vmul.f32 %v603, 2.0
        %v772 = vmul.f32 %v541, 2.0
        %v773 = vmul.f32 %v606, 2.0
        %v774 = vsub.f32 %v710, %v742
        %v775 = vsub.f32 %v711, %v743
        %v776 = vsub.f32 %v712, %v744
        %v777 = vsub.f32 %v713, %v745
        %v778 = vsub.f32 %v714, %v746
        %v779 = vsub.f32 %v715, %v747
        %v780 = vsub.f32 %v716, %v748
        %v781 = vsub.f32 %v717, %v749
        %v782 = vsub.f32 %v718, %v750
        %v783 = vsub.f32 %v719, %v751
        %v784 = vsub.f32 %v720, %v752
        %v785 = vsub.f32 %v721, %v753
        %v786 = vsub.f32 %v722, %v754
        %v787 = vsub.f32 %v723, %v755
        %v788 = vsub.f32 %v724, %v756
        %v789 = vsub.f32 %v725, %v757
        %v790 = vsub.f32 %v726, %v758
        %v791 = vsub.f32 %v727, %v759
        %v792 = vsub.f32 %v728, %v760
        %v793 = vsub.f32 %v729, %v761
        %v794 = vsub.f32 %v730, %v762
        %v795 = vsub.f32 %v731, %v763
        %v796 = vsub.f32 %v732, %v764
        %v797 = vsub.f32 %v733, %v765
        %v798 = vsub.f32 %v734, %v766
        %v799 = vsub.f32 %v735, %v767
        %v800 = vsub.f32 %v736, %v768
        %v801 = vsub.f32 %v737, %v769
        %v802 = vsub.f32 %v738, %v770
        %v803 = vsub.f32 %v739, %v771
        %v804 = vsub.f32 %v740, %v772
        %v805 = vsub.f32 %v741, %v773
        %v806 = vmax.f32 %v774, 0.0
        %v807 = vmax.f32 %v775, 0.0
        %v808 = vmax.f32 %v776, 0.0
        %v809 = vmax.f32 %v777, 0.0
        %v810 = vmax.f32 %v778, 0.0
        %v811 = vmax.f32 %v779, 0.0
        %v812 = vmax.f32 %v780, 0.0
        %v813 = vmax.f32 %v781, 0.0
        %v814 = vmax.f32 %v782, 0.0
        %v815 = vmax.f32 %v783, 0.0
        %v816 = vmax.f32 %v784, 0.0
        %v817 = vmax.f32 %v785, 0.0
        %v818 = vmax.f32 %v786, 0.0
        %v819 = vmax.f32 %v787, 0.0
        %v820 = vmax.f32 %v788, 0.0
        %v821 = vmax.f32 %v789, 0.0
        %v822 = vmax.f32 %v790, 0.0
        %v823 = vmax.f32 %v791, 0.0
        %v824 = vmax.f32 %v792, 0.0
        %v825 = vmax.f32 %v793, 0.0
        %v826 = vmax.f32 %v794, 0.0
        %v827 = vmax.f32 %v795, 0.0
        %v828 = vmax.f32 %v796, 0.0
        %v829 = vmax.f32 %v797, 0.0
        %v830 = vmax.f32 %v798, 0.0
        %v831 = vmax.f32 %v799, 0.0
        %v832 = vmax.f32 %v800, 0.0
        %v833 = vmax.f32 %v801, 0.0
        %v834 = vmax.f32 %v802, 0.0
        %v835 = vmax.f32 %v803, 0.0
        %v836 = vmax.f32 %v804, 0.0
        %v837 = vmax.f32 %v805, 0.0
        %v838 = vrsqrt.pop %v806
        %v839 = vmul.f32 %v838, %v806
        %v840 = vmul.f32 %v839, %v838
        %v841 = vmul.f32 0.5, %v840
        %v842 = vsub.f32 1.5, %v841
        %v843 = vmul.f32 %v838, %v842
        %v844 = vmul.f32 %v806, %v843
        %vm845 = vcmp.eq.f32.partialorder %v806, inf
        %v846 = vsel %vm845, %v806, %v844
        %vm847 = vcmp.eq.f32.partialorder %v806, 0.0
        %v848 = vand.u32 %v806, 2147483648
        %v849 = vsel %vm847, %v848, %v846
        %v850 = vrsqrt.pop %v807
        %v851 = vmul.f32 %v850, %v807
        %v852 = vmul.f32 %v851, %v850
        %v853 = vmul.f32 0.5, %v852
        %v854 = vsub.f32 1.5, %v853
        %v855 = vmul.f32 %v850, %v854
        %v856 = vmul.f32 %v807, %v855
        %vm857 = vcmp.eq.f32.partialorder %v807, inf
        %v858 = vsel %vm857, %v807, %v856
        %vm859 = vcmp.eq.f32.partialorder %v807, 0.0
        %v860 = vand.u32 %v807, 2147483648
        %v861 = vsel %vm859, %v860, %v858
        %v862 = vrsqrt.pop %v808
        %v863 = vmul.f32 %v862, %v808
        %v864 = vmul.f32 %v863, %v862
        %v865 = vmul.f32 0.5, %v864
        %v866 = vsub.f32 1.5, %v865
        %v867 = vmul.f32 %v862, %v866
        %v868 = vmul.f32 %v808, %v867
        %vm869 = vcmp.eq.f32.partialorder %v808, inf
        %v870 = vsel %vm869, %v808, %v868
        %vm871 = vcmp.eq.f32.partialorder %v808, 0.0
        %v872 = vand.u32 %v808, 2147483648
        %v873 = vsel %vm871, %v872, %v870
        %v874 = vrsqrt.pop %v809
        %v875 = vmul.f32 %v874, %v809
        %v876 = vmul.f32 %v875, %v874
        %v877 = vmul.f32 0.5, %v876
        %v878 = vsub.f32 1.5, %v877
        %v879 = vmul.f32 %v874, %v878
        %v880 = vmul.f32 %v809, %v879
        %vm881 = vcmp.eq.f32.partialorder %v809, inf
        %v882 = vsel %vm881, %v809, %v880
        %vm883 = vcmp.eq.f32.partialorder %v809, 0.0
        %v884 = vand.u32 %v809, 2147483648
        %v885 = vsel %vm883, %v884, %v882
        %v886 = vrsqrt.pop %v810
        %v887 = vmul.f32 %v886, %v810
        %v888 = vmul.f32 %v887, %v886
        %v889 = vmul.f32 0.5, %v888
        %v890 = vsub.f32 1.5, %v889
        %v891 = vmul.f32 %v886, %v890
        %v892 = vmul.f32 %v810, %v891
        %vm893 = vcmp.eq.f32.partialorder %v810, inf
        %v894 = vsel %vm893, %v810, %v892
        %vm895 = vcmp.eq.f32.partialorder %v810, 0.0
        %v896 = vand.u32 %v810, 2147483648
        %v897 = vsel %vm895, %v896, %v894
        %v898 = vrsqrt.pop %v811
        %v899 = vmul.f32 %v898, %v811
        %v900 = vmul.f32 %v899, %v898
        %v901 = vmul.f32 0.5, %v900
        %v902 = vsub.f32 1.5, %v901
        %v903 = vmul.f32 %v898, %v902
        %v904 = vmul.f32 %v811, %v903
        %vm905 = vcmp.eq.f32.partialorder %v811, inf
        %v906 = vsel %vm905, %v811, %v904
        %vm907 = vcmp.eq.f32.partialorder %v811, 0.0
        %v908 = vand.u32 %v811, 2147483648
        %v909 = vsel %vm907, %v908, %v906
        %v910 = vrsqrt.pop %v812
        %v911 = vmul.f32 %v910, %v812
        %v912 = vmul.f32 %v911, %v910
        %v913 = vmul.f32 0.5, %v912
        %v914 = vsub.f32 1.5, %v913
        %v915 = vmul.f32 %v910, %v914
        %v916 = vmul.f32 %v812, %v915
        %vm917 = vcmp.eq.f32.partialorder %v812, inf
        %v918 = vsel %vm917, %v812, %v916
        %vm919 = vcmp.eq.f32.partialorder %v812, 0.0
        %v920 = vand.u32 %v812, 2147483648
        %v921 = vsel %vm919, %v920, %v918
        %v922 = vrsqrt.pop %v813
        %v923 = vmul.f32 %v922, %v813
        %v924 = vmul.f32 %v923, %v922
        %v925 = vmul.f32 0.5, %v924
        %v926 = vsub.f32 1.5, %v925
        %v927 = vmul.f32 %v922, %v926
        %v928 = vmul.f32 %v813, %v927
        %vm929 = vcmp.eq.f32.partialorder %v813, inf
        %v930 = vsel %vm929, %v813, %v928
        %vm931 = vcmp.eq.f32.partialorder %v813, 0.0
        %v932 = vand.u32 %v813, 2147483648
        %v933 = vsel %vm931, %v932, %v930
        %v934 = vrsqrt.pop %v814
        %v935 = vmul.f32 %v934, %v814
        %v936 = vmul.f32 %v935, %v934
        %v937 = vmul.f32 0.5, %v936
        %v938 = vsub.f32 1.5, %v937
        %v939 = vmul.f32 %v934, %v938
        %v940 = vmul.f32 %v814, %v939
        %vm941 = vcmp.eq.f32.partialorder %v814, inf
        %v942 = vsel %vm941, %v814, %v940
        %vm943 = vcmp.eq.f32.partialorder %v814, 0.0
        %v944 = vand.u32 %v814, 2147483648
        %v945 = vsel %vm943, %v944, %v942
        %v946 = vrsqrt.pop %v815
        %v947 = vmul.f32 %v946, %v815
        %v948 = vmul.f32 %v947, %v946
        %v949 = vmul.f32 0.5, %v948
        %v950 = vsub.f32 1.5, %v949
        %v951 = vmul.f32 %v946, %v950
        %v952 = vmul.f32 %v815, %v951
        %vm953 = vcmp.eq.f32.partialorder %v815, inf
        %v954 = vsel %vm953, %v815, %v952
        %vm955 = vcmp.eq.f32.partialorder %v815, 0.0
        %v956 = vand.u32 %v815, 2147483648
        %v957 = vsel %vm955, %v956, %v954
        %v958 = vrsqrt.pop %v816
        %v959 = vmul.f32 %v958, %v816
        %v960 = vmul.f32 %v959, %v958
        %v961 = vmul.f32 0.5, %v960
        %v962 = vsub.f32 1.5, %v961
        %v963 = vmul.f32 %v958, %v962
        %v964 = vmul.f32 %v816, %v963
        %vm965 = vcmp.eq.f32.partialorder %v816, inf
        %v966 = vsel %vm965, %v816, %v964
        %vm967 = vcmp.eq.f32.partialorder %v816, 0.0
        %v968 = vand.u32 %v816, 2147483648
        %v969 = vsel %vm967, %v968, %v966
        %v970 = vrsqrt.pop %v817
        %v971 = vmul.f32 %v970, %v817
        %v972 = vmul.f32 %v971, %v970
        %v973 = vmul.f32 0.5, %v972
        %v974 = vsub.f32 1.5, %v973
        %v975 = vmul.f32 %v970, %v974
        %v976 = vmul.f32 %v817, %v975
        %vm977 = vcmp.eq.f32.partialorder %v817, inf
        %v978 = vsel %vm977, %v817, %v976
        %vm979 = vcmp.eq.f32.partialorder %v817, 0.0
        %v980 = vand.u32 %v817, 2147483648
        %v981 = vsel %vm979, %v980, %v978
        %v982 = vrsqrt.pop %v818
        %v983 = vmul.f32 %v982, %v818
        %v984 = vmul.f32 %v983, %v982
        %v985 = vmul.f32 0.5, %v984
        %v986 = vsub.f32 1.5, %v985
        %v987 = vmul.f32 %v982, %v986
        %v988 = vmul.f32 %v818, %v987
        %vm989 = vcmp.eq.f32.partialorder %v818, inf
        %v990 = vsel %vm989, %v818, %v988
        %vm991 = vcmp.eq.f32.partialorder %v818, 0.0
        %v992 = vand.u32 %v818, 2147483648
        %v993 = vsel %vm991, %v992, %v990
        %v994 = vrsqrt.pop %v819
        %v995 = vmul.f32 %v994, %v819
        %v996 = vmul.f32 %v995, %v994
        %v997 = vmul.f32 0.5, %v996
        %v998 = vsub.f32 1.5, %v997
        %v999 = vmul.f32 %v994, %v998
        %v1000 = vmul.f32 %v819, %v999
        %vm1001 = vcmp.eq.f32.partialorder %v819, inf
        %v1002 = vsel %vm1001, %v819, %v1000
        %vm1003 = vcmp.eq.f32.partialorder %v819, 0.0
        %v1004 = vand.u32 %v819, 2147483648
        %v1005 = vsel %vm1003, %v1004, %v1002
        %v1006 = vrsqrt.pop %v820
        %v1007 = vmul.f32 %v1006, %v820
        %v1008 = vmul.f32 %v1007, %v1006
        %v1009 = vmul.f32 0.5, %v1008
        %v1010 = vsub.f32 1.5, %v1009
        %v1011 = vmul.f32 %v1006, %v1010
        %v1012 = vmul.f32 %v820, %v1011
        %vm1013 = vcmp.eq.f32.partialorder %v820, inf
        %v1014 = vsel %vm1013, %v820, %v1012
        %vm1015 = vcmp.eq.f32.partialorder %v820, 0.0
        %v1016 = vand.u32 %v820, 2147483648
        %v1017 = vsel %vm1015, %v1016, %v1014
        %v1018 = vrsqrt.pop %v821
        %v1019 = vmul.f32 %v1018, %v821
        %v1020 = vmul.f32 %v1019, %v1018
        %v1021 = vmul.f32 0.5, %v1020
        %v1022 = vsub.f32 1.5, %v1021
        %v1023 = vmul.f32 %v1018, %v1022
        %v1024 = vmul.f32 %v821, %v1023
        %vm1025 = vcmp.eq.f32.partialorder %v821, inf
        %v1026 = vsel %vm1025, %v821, %v1024
        %vm1027 = vcmp.eq.f32.partialorder %v821, 0.0
        %v1028 = vand.u32 %v821, 2147483648
        %v1029 = vsel %vm1027, %v1028, %v1026
        %v1030 = vrsqrt.pop %v822
        %v1031 = vmul.f32 %v1030, %v822
        %v1032 = vmul.f32 %v1031, %v1030
        %v1033 = vmul.f32 0.5, %v1032
        %v1034 = vsub.f32 1.5, %v1033
        %v1035 = vmul.f32 %v1030, %v1034
        %v1036 = vmul.f32 %v822, %v1035
        %vm1037 = vcmp.eq.f32.partialorder %v822, inf
        %v1038 = vsel %vm1037, %v822, %v1036
        %vm1039 = vcmp.eq.f32.partialorder %v822, 0.0
        %v1040 = vand.u32 %v822, 2147483648
        %v1041 = vsel %vm1039, %v1040, %v1038
        %v1042 = vrsqrt.pop %v823
        %v1043 = vmul.f32 %v1042, %v823
        %v1044 = vmul.f32 %v1043, %v1042
        %v1045 = vmul.f32 0.5, %v1044
        %v1046 = vsub.f32 1.5, %v1045
        %v1047 = vmul.f32 %v1042, %v1046
        %v1048 = vmul.f32 %v823, %v1047
        %vm1049 = vcmp.eq.f32.partialorder %v823, inf
        %v1050 = vsel %vm1049, %v823, %v1048
        %vm1051 = vcmp.eq.f32.partialorder %v823, 0.0
        %v1052 = vand.u32 %v823, 2147483648
        %v1053 = vsel %vm1051, %v1052, %v1050
        %v1054 = vrsqrt.pop %v824
        %v1055 = vmul.f32 %v1054, %v824
        %v1056 = vmul.f32 %v1055, %v1054
        %v1057 = vmul.f32 0.5, %v1056
        %v1058 = vsub.f32 1.5, %v1057
        %v1059 = vmul.f32 %v1054, %v1058
        %v1060 = vmul.f32 %v824, %v1059
        %vm1061 = vcmp.eq.f32.partialorder %v824, inf
        %v1062 = vsel %vm1061, %v824, %v1060
        %vm1063 = vcmp.eq.f32.partialorder %v824, 0.0
        %v1064 = vand.u32 %v824, 2147483648
        %v1065 = vsel %vm1063, %v1064, %v1062
        %v1066 = vrsqrt.pop %v825
        %v1067 = vmul.f32 %v1066, %v825
        %v1068 = vmul.f32 %v1067, %v1066
        %v1069 = vmul.f32 0.5, %v1068
        %v1070 = vsub.f32 1.5, %v1069
        %v1071 = vmul.f32 %v1066, %v1070
        %v1072 = vmul.f32 %v825, %v1071
        %vm1073 = vcmp.eq.f32.partialorder %v825, inf
        %v1074 = vsel %vm1073, %v825, %v1072
        %vm1075 = vcmp.eq.f32.partialorder %v825, 0.0
        %v1076 = vand.u32 %v825, 2147483648
        %v1077 = vsel %vm1075, %v1076, %v1074
        %v1078 = vrsqrt.pop %v826
        %v1079 = vmul.f32 %v1078, %v826
        %v1080 = vmul.f32 %v1079, %v1078
        %v1081 = vmul.f32 0.5, %v1080
        %v1082 = vsub.f32 1.5, %v1081
        %v1083 = vmul.f32 %v1078, %v1082
        %v1084 = vmul.f32 %v826, %v1083
        %vm1085 = vcmp.eq.f32.partialorder %v826, inf
        %v1086 = vsel %vm1085, %v826, %v1084
        %vm1087 = vcmp.eq.f32.partialorder %v826, 0.0
        %v1088 = vand.u32 %v826, 2147483648
        %v1089 = vsel %vm1087, %v1088, %v1086
        %v1090 = vrsqrt.pop %v827
        %v1091 = vmul.f32 %v1090, %v827
        %v1092 = vmul.f32 %v1091, %v1090
        %v1093 = vmul.f32 0.5, %v1092
        %v1094 = vsub.f32 1.5, %v1093
        %v1095 = vmul.f32 %v1090, %v1094
        %v1096 = vmul.f32 %v827, %v1095
        %vm1097 = vcmp.eq.f32.partialorder %v827, inf
        %v1098 = vsel %vm1097, %v827, %v1096
        %vm1099 = vcmp.eq.f32.partialorder %v827, 0.0
        %v1100 = vand.u32 %v827, 2147483648
        %v1101 = vsel %vm1099, %v1100, %v1098
        %v1102 = vrsqrt.pop %v828
        %v1103 = vmul.f32 %v1102, %v828
        %v1104 = vmul.f32 %v1103, %v1102
        %v1105 = vmul.f32 0.5, %v1104
        %v1106 = vsub.f32 1.5, %v1105
        %v1107 = vmul.f32 %v1102, %v1106
        %v1108 = vmul.f32 %v828, %v1107
        %vm1109 = vcmp.eq.f32.partialorder %v828, inf
        %v1110 = vsel %vm1109, %v828, %v1108
        %vm1111 = vcmp.eq.f32.partialorder %v828, 0.0
        %v1112 = vand.u32 %v828, 2147483648
        %v1113 = vsel %vm1111, %v1112, %v1110
        %v1114 = vrsqrt.pop %v829
        %v1115 = vmul.f32 %v1114, %v829
        %v1116 = vmul.f32 %v1115, %v1114
        %v1117 = vmul.f32 0.5, %v1116
        %v1118 = vsub.f32 1.5, %v1117
        %v1119 = vmul.f32 %v1114, %v1118
        %v1120 = vmul.f32 %v829, %v1119
        %vm1121 = vcmp.eq.f32.partialorder %v829, inf
        %v1122 = vsel %vm1121, %v829, %v1120
        %vm1123 = vcmp.eq.f32.partialorder %v829, 0.0
        %v1124 = vand.u32 %v829, 2147483648
        %v1125 = vsel %vm1123, %v1124, %v1122
        %v1126 = vrsqrt.pop %v830
        %v1127 = vmul.f32 %v1126, %v830
        %v1128 = vmul.f32 %v1127, %v1126
        %v1129 = vmul.f32 0.5, %v1128
        %v1130 = vsub.f32 1.5, %v1129
        %v1131 = vmul.f32 %v1126, %v1130
        %v1132 = vmul.f32 %v830, %v1131
        %vm1133 = vcmp.eq.f32.partialorder %v830, inf
        %v1134 = vsel %vm1133, %v830, %v1132
        %vm1135 = vcmp.eq.f32.partialorder %v830, 0.0
        %v1136 = vand.u32 %v830, 2147483648
        %v1137 = vsel %vm1135, %v1136, %v1134
        %v1138 = vrsqrt.pop %v831
        %v1139 = vmul.f32 %v1138, %v831
        %v1140 = vmul.f32 %v1139, %v1138
        %v1141 = vmul.f32 0.5, %v1140
        %v1142 = vsub.f32 1.5, %v1141
        %v1143 = vmul.f32 %v1138, %v1142
        %v1144 = vmul.f32 %v831, %v1143
        %vm1145 = vcmp.eq.f32.partialorder %v831, inf
        %v1146 = vsel %vm1145, %v831, %v1144
        %vm1147 = vcmp.eq.f32.partialorder %v831, 0.0
        %v1148 = vand.u32 %v831, 2147483648
        %v1149 = vsel %vm1147, %v1148, %v1146
        %v1150 = vrsqrt.pop %v832
        %v1151 = vmul.f32 %v1150, %v832
        %v1152 = vmul.f32 %v1151, %v1150
        %v1153 = vmul.f32 0.5, %v1152
        %v1154 = vsub.f32 1.5, %v1153
        %v1155 = vmul.f32 %v1150, %v1154
        %v1156 = vmul.f32 %v832, %v1155
        %vm1157 = vcmp.eq.f32.partialorder %v832, inf
        %v1158 = vsel %vm1157, %v832, %v1156
        %vm1159 = vcmp.eq.f32.partialorder %v832, 0.0
        %v1160 = vand.u32 %v832, 2147483648
        %v1161 = vsel %vm1159, %v1160, %v1158
        %v1162 = vrsqrt.pop %v833
        %v1163 = vmul.f32 %v1162, %v833
        %v1164 = vmul.f32 %v1163, %v1162
        %v1165 = vmul.f32 0.5, %v1164
        %v1166 = vsub.f32 1.5, %v1165
        %v1167 = vmul.f32 %v1162, %v1166
        %v1168 = vmul.f32 %v833, %v1167
        %vm1169 = vcmp.eq.f32.partialorder %v833, inf
        %v1170 = vsel %vm1169, %v833, %v1168
        %vm1171 = vcmp.eq.f32.partialorder %v833, 0.0
        %v1172 = vand.u32 %v833, 2147483648
        %v1173 = vsel %vm1171, %v1172, %v1170
        %v1174 = vrsqrt.pop %v834
        %v1175 = vmul.f32 %v1174, %v834
        %v1176 = vmul.f32 %v1175, %v1174
        %v1177 = vmul.f32 0.5, %v1176
        %v1178 = vsub.f32 1.5, %v1177
        %v1179 = vmul.f32 %v1174, %v1178
        %v1180 = vmul.f32 %v834, %v1179
        %vm1181 = vcmp.eq.f32.partialorder %v834, inf
        %v1182 = vsel %vm1181, %v834, %v1180
        %vm1183 = vcmp.eq.f32.partialorder %v834, 0.0
        %v1184 = vand.u32 %v834, 2147483648
        %v1185 = vsel %vm1183, %v1184, %v1182
        %v1186 = vrsqrt.pop %v835
        %v1187 = vmul.f32 %v1186, %v835
        %v1188 = vmul.f32 %v1187, %v1186
        %v1189 = vmul.f32 0.5, %v1188
        %v1190 = vsub.f32 1.5, %v1189
        %v1191 = vmul.f32 %v1186, %v1190
        %v1192 = vmul.f32 %v835, %v1191
        %vm1193 = vcmp.eq.f32.partialorder %v835, inf
        %v1194 = vsel %vm1193, %v835, %v1192
        %vm1195 = vcmp.eq.f32.partialorder %v835, 0.0
        %v1196 = vand.u32 %v835, 2147483648
        %v1197 = vsel %vm1195, %v1196, %v1194
        %v1198 = vrsqrt.pop %v836
        %v1199 = vmul.f32 %v1198, %v836
        %v1200 = vmul.f32 %v1199, %v1198
        %v1201 = vmul.f32 0.5, %v1200
        %v1202 = vsub.f32 1.5, %v1201
        %v1203 = vmul.f32 %v1198, %v1202
        %v1204 = vmul.f32 %v836, %v1203
        %vm1205 = vcmp.eq.f32.partialorder %v836, inf
        %v1206 = vsel %vm1205, %v836, %v1204
        %vm1207 = vcmp.eq.f32.partialorder %v836, 0.0
        %v1208 = vand.u32 %v836, 2147483648
        %v1209 = vsel %vm1207, %v1208, %v1206
        %v1210 = vrsqrt.pop %v837
        %v1211 = vmul.f32 %v1210, %v837
        %v1212 = vmul.f32 %v1211, %v1210
        %v1213 = vmul.f32 0.5, %v1212
        %v1214 = vsub.f32 1.5, %v1213
        %v1215 = vmul.f32 %v1210, %v1214
        %v1216 = vmul.f32 %v837, %v1215
        %vm1217 = vcmp.eq.f32.partialorder %v837, inf
        %v1218 = vsel %vm1217, %v837, %v1216
        %vm1219 = vcmp.eq.f32.partialorder %v837, 0.0
        %v1220 = vand.u32 %v837, 2147483648
        %v1221 = vsel %vm1219, %v1220, %v1218
        %v1222 = vld [vmem:[%s306] sm:$0xff]
        %v1223 = vld [vmem:[%s306 + $0x8] sm:$0xff]
        %v1224 = vld [vmem:[%s306 + $0x10] sm:$0xff]
        %v1225 = vld [vmem:[%s306 + $0x18] sm:$0xff]
        %v1226 = vld [vmem:[%s306 + $0x20] sm:$0xff]
        %v1227 = vld [vmem:[%s306 + $0x28] sm:$0xff]
        %v1228 = vld [vmem:[%s306 + $0x30] sm:$0xff]
        %v1229 = vld [vmem:[%s306 + $0x38] sm:$0xff]
        %v1230 = vld [vmem:[%s306 + $0x40] sm:$0xff]
        %v1231 = vld [vmem:[%s306 + $0x48] sm:$0xff]
        %v1232 = vld [vmem:[%s306 + $0x50] sm:$0xff]
        %v1233 = vld [vmem:[%s306 + $0x58] sm:$0xff]
        %v1234 = vld [vmem:[%s306 + $0x60] sm:$0xff]
        %v1235 = vld [vmem:[%s306 + $0x68] sm:$0xff]
        %v1236 = vld [vmem:[%s306 + $0x70] sm:$0xff]
        %v1237 = vld [vmem:[%s306 + $0x78] sm:$0xff]
        %v1238 = vld [vmem:[%s306 + $0x80] sm:$0xff]
        %v1239 = vld [vmem:[%s306 + $0x88] sm:$0xff]
        %v1240 = vld [vmem:[%s306 + $0x90] sm:$0xff]
        %v1241 = vld [vmem:[%s306 + $0x98] sm:$0xff]
        %v1242 = vld [vmem:[%s306 + $0xa0] sm:$0xff]
        %v1243 = vld [vmem:[%s306 + $0xa8] sm:$0xff]
        %v1244 = vld [vmem:[%s306 + $0xb0] sm:$0xff]
        %v1245 = vld [vmem:[%s306 + $0xb8] sm:$0xff]
        %v1246 = vld [vmem:[%s306 + $0xc0] sm:$0xff]
        %v1247 = vld [vmem:[%s306 + $0xc8] sm:$0xff]
        %v1248 = vld [vmem:[%s306 + $0xd0] sm:$0xff]
        %v1249 = vld [vmem:[%s306 + $0xd8] sm:$0xff]
        %v1250 = vld [vmem:[%s306 + $0xe0] sm:$0xff]
        %v1251 = vld [vmem:[%s306 + $0xe8] sm:$0xff]
        %v1252 = vld [vmem:[%s306 + $0xf0] sm:$0xff]
        %v1253 = vld [vmem:[%s306 + $0xf8] sm:$0xff]
        %v1254 = vsub.f32 %v1222, %v849
        %v1255 = vsub.f32 %v1223, %v861
        %v1256 = vsub.f32 %v1224, %v873
        %v1257 = vsub.f32 %v1225, %v885
        %v1258 = vsub.f32 %v1226, %v897
        %v1259 = vsub.f32 %v1227, %v909
        %v1260 = vsub.f32 %v1228, %v921
        %v1261 = vsub.f32 %v1229, %v933
        %v1262 = vsub.f32 %v1230, %v945
        %v1263 = vsub.f32 %v1231, %v957
        %v1264 = vsub.f32 %v1232, %v969
        %v1265 = vsub.f32 %v1233, %v981
        %v1266 = vsub.f32 %v1234, %v993
        %v1267 = vsub.f32 %v1235, %v1005
        %v1268 = vsub.f32 %v1236, %v1017
        %v1269 = vsub.f32 %v1237, %v1029
        %v1270 = vsub.f32 %v1238, %v1041
        %v1271 = vsub.f32 %v1239, %v1053
        %v1272 = vsub.f32 %v1240, %v1065
        %v1273 = vsub.f32 %v1241, %v1077
        %v1274 = vsub.f32 %v1242, %v1089
        %v1275 = vsub.f32 %v1243, %v1101
        %v1276 = vsub.f32 %v1244, %v1113
        %v1277 = vsub.f32 %v1245, %v1125
        %v1278 = vsub.f32 %v1246, %v1137
        %v1279 = vsub.f32 %v1247, %v1149
        %v1280 = vsub.f32 %v1248, %v1161
        %v1281 = vsub.f32 %v1249, %v1173
        %v1282 = vsub.f32 %v1250, %v1185
        %v1283 = vsub.f32 %v1251, %v1197
        %v1284 = vsub.f32 %v1252, %v1209
        %v1285 = vsub.f32 %v1253, %v1221
        %v1286 = vand.u32 2147483647, %v1254
        %v1287 = vand.u32 2147483647, %v1255
        %v1288 = vand.u32 2147483647, %v1256
        %v1289 = vand.u32 2147483647, %v1257
        %v1290 = vand.u32 2147483647, %v1258
        %v1291 = vand.u32 2147483647, %v1259
        %v1292 = vand.u32 2147483647, %v1260
        %v1293 = vand.u32 2147483647, %v1261
        %v1294 = vand.u32 2147483647, %v1262
        %v1295 = vand.u32 2147483647, %v1263
        %v1296 = vand.u32 2147483647, %v1264
        %v1297 = vand.u32 2147483647, %v1265
        %v1298 = vand.u32 2147483647, %v1266
        %v1299 = vand.u32 2147483647, %v1267
        %v1300 = vand.u32 2147483647, %v1268
        %v1301 = vand.u32 2147483647, %v1269
        %v1302 = vand.u32 2147483647, %v1270
        %v1303 = vand.u32 2147483647, %v1271
        %v1304 = vand.u32 2147483647, %v1272
        %v1305 = vand.u32 2147483647, %v1273
        %v1306 = vand.u32 2147483647, %v1274
        %v1307 = vand.u32 2147483647, %v1275
        %v1308 = vand.u32 2147483647, %v1276
        %v1309 = vand.u32 2147483647, %v1277
        %v1310 = vand.u32 2147483647, %v1278
        %v1311 = vand.u32 2147483647, %v1279
        %v1312 = vand.u32 2147483647, %v1280
        %v1313 = vand.u32 2147483647, %v1281
        %v1314 = vand.u32 2147483647, %v1282
        %v1315 = vand.u32 2147483647, %v1283
        %v1316 = vand.u32 2147483647, %v1284
        %v1317 = vand.u32 2147483647, %v1285
        %v1318 = vadd.f32 %v1286, %v1287
        %v1319 = vadd.f32 %v1288, %v1289
        %v1320 = vadd.f32 %v1290, %v1291
        %v1321 = vadd.f32 %v1292, %v1293
        %v1322 = vadd.f32 %v1294, %v1295
        %v1323 = vadd.f32 %v1296, %v1297
        %v1324 = vadd.f32 %v1298, %v1299
        %v1325 = vadd.f32 %v1300, %v1301
        %v1326 = vadd.f32 %v1302, %v1303
        %v1327 = vadd.f32 %v1304, %v1305
        %v1328 = vadd.f32 %v1306, %v1307
        %v1329 = vadd.f32 %v1308, %v1309
        %v1330 = vadd.f32 %v1310, %v1311
        %v1331 = vadd.f32 %v1312, %v1313
        %v1332 = vadd.f32 %v1314, %v1315
        %v1333 = vadd.f32 %v1316, %v1317
        %v1334 = vld [vmem:[#allocation2] sm:$0xff]
        %v1335 = vld [vmem:[#allocation2 + $0x8] sm:$0xff]
        %v1336 = vld [vmem:[#allocation2 + $0x10] sm:$0xff]
        %v1337 = vld [vmem:[#allocation2 + $0x18] sm:$0xff]
        %v1338 = vld [vmem:[#allocation2 + $0x20] sm:$0xff]
        %v1339 = vld [vmem:[#allocation2 + $0x28] sm:$0xff]
        %v1340 = vld [vmem:[#allocation2 + $0x30] sm:$0xff]
        %v1341 = vld [vmem:[#allocation2 + $0x38] sm:$0xff]
        %v1342 = vld [vmem:[#allocation2 + $0x40] sm:$0xff]
        %v1343 = vld [vmem:[#allocation2 + $0x48] sm:$0xff]
        %v1344 = vld [vmem:[#allocation2 + $0x50] sm:$0xff]
        %v1345 = vld [vmem:[#allocation2 + $0x58] sm:$0xff]
        %v1346 = vld [vmem:[#allocation2 + $0x60] sm:$0xff]
        %v1347 = vld [vmem:[#allocation2 + $0x68] sm:$0xff]
        %v1348 = vld [vmem:[#allocation2 + $0x70] sm:$0xff]
        %v1349 = vld [vmem:[#allocation2 + $0x78] sm:$0xff]
        %v1350 = vadd.f32 %v1334, %v1318
        %v1351 = vadd.f32 %v1335, %v1319
        %v1352 = vadd.f32 %v1336, %v1320
        %v1353 = vadd.f32 %v1337, %v1321
        %v1354 = vadd.f32 %v1338, %v1322
        %v1355 = vadd.f32 %v1339, %v1323
        %v1356 = vadd.f32 %v1340, %v1324
        %v1357 = vadd.f32 %v1341, %v1325
        %v1358 = vadd.f32 %v1342, %v1326
        %v1359 = vadd.f32 %v1343, %v1327
        %v1360 = vadd.f32 %v1344, %v1328
        %v1361 = vadd.f32 %v1345, %v1329
        %v1362 = vadd.f32 %v1346, %v1330
        %v1363 = vadd.f32 %v1347, %v1331
        %v1364 = vadd.f32 %v1348, %v1332
        %v1365 = vadd.f32 %v1349, %v1333
        %1366 = vst [vmem:[#allocation2] sm:$0xff] %v1350
        %1367 = vst [vmem:[#allocation2 + $0x8] sm:$0xff] %v1351
        %1368 = vst [vmem:[#allocation2 + $0x10] sm:$0xff] %v1352
        %1369 = vst [vmem:[#allocation2 + $0x18] sm:$0xff] %v1353
        %1370 = vst [vmem:[#allocation2 + $0x20] sm:$0xff] %v1354
        %1371 = vst [vmem:[#allocation2 + $0x28] sm:$0xff] %v1355
        %1372 = vst [vmem:[#allocation2 + $0x30] sm:$0xff] %v1356
        %1373 = vst [vmem:[#allocation2 + $0x38] sm:$0xff] %v1357
        %1374 = vst [vmem:[#allocation2 + $0x40] sm:$0xff] %v1358
        %1375 = vst [vmem:[#allocation2 + $0x48] sm:$0xff] %v1359
        %1376 = vst [vmem:[#allocation2 + $0x50] sm:$0xff] %v1360
        %1377 = vst [vmem:[#allocation2 + $0x58] sm:$0xff] %v1361
        %1378 = vst [vmem:[#allocation2 + $0x60] sm:$0xff] %v1362
        %1379 = vst [vmem:[#allocation2 + $0x68] sm:$0xff] %v1363
        %1380 = vst [vmem:[#allocation2 + $0x70] sm:$0xff] %v1364
        %1381 = vst [vmem:[#allocation2 + $0x78] sm:$0xff] %v1365
        %p1382 = scmp.eq.s32.totalorder %s24, 1
        // Predicated region
        $region72: #{tpu_custom_call.1} parent=58 // pred_check
          %p1383 = pneg %p1382
        $region73: #{tpu_custom_call.1} parent=58 // pred_check_branch
          %1385 = sbr.rel (%p1383) target = $region75
        $region74: #{tpu_custom_call.1} parent=58 // pred_region
          %v1386 = vld [vmem:[#allocation2] sm:$0xff]
          %v1387 = vld [vmem:[#allocation2 + $0x8] sm:$0xff]
          %v1388 = vld [vmem:[#allocation2 + $0x10] sm:$0xff]
          %v1389 = vld [vmem:[#allocation2 + $0x18] sm:$0xff]
          %v1390 = vld [vmem:[#allocation2 + $0x20] sm:$0xff]
          %v1391 = vld [vmem:[#allocation2 + $0x28] sm:$0xff]
          %v1392 = vld [vmem:[#allocation2 + $0x30] sm:$0xff]
          %v1393 = vld [vmem:[#allocation2 + $0x38] sm:$0xff]
          %v1394 = vld [vmem:[#allocation2 + $0x40] sm:$0xff]
          %v1395 = vld [vmem:[#allocation2 + $0x48] sm:$0xff]
          %v1396 = vld [vmem:[#allocation2 + $0x50] sm:$0xff]
          %v1397 = vld [vmem:[#allocation2 + $0x58] sm:$0xff]
          %v1398 = vld [vmem:[#allocation2 + $0x60] sm:$0xff]
          %v1399 = vld [vmem:[#allocation2 + $0x68] sm:$0xff]
          %v1400 = vld [vmem:[#allocation2 + $0x70] sm:$0xff]
          %v1401 = vld [vmem:[#allocation2 + $0x78] sm:$0xff]
          %1402 = vadd.xlane.f32.xlu0 %v1386
          %v1403 = vpop.xlane.xlu0 %1402
          %1404 = vadd.xlane.f32.xlu0 %v1387
          %v1405 = vpop.xlane.xlu0 %1404
          %1406 = vadd.xlane.f32.xlu0 %v1388
          %v1407 = vpop.xlane.xlu0 %1406
          %1408 = vadd.xlane.f32.xlu0 %v1389
          %v1409 = vpop.xlane.xlu0 %1408
          %1410 = vadd.xlane.f32.xlu0 %v1390
          %v1411 = vpop.xlane.xlu0 %1410
          %1412 = vadd.xlane.f32.xlu0 %v1391
          %v1413 = vpop.xlane.xlu0 %1412
          %1414 = vadd.xlane.f32.xlu0 %v1392
          %v1415 = vpop.xlane.xlu0 %1414
          %1416 = vadd.xlane.f32.xlu0 %v1393
          %v1417 = vpop.xlane.xlu0 %1416
          %1418 = vadd.xlane.f32.xlu0 %v1394
          %v1419 = vpop.xlane.xlu0 %1418
          %1420 = vadd.xlane.f32.xlu0 %v1395
          %v1421 = vpop.xlane.xlu0 %1420
          %1422 = vadd.xlane.f32.xlu0 %v1396
          %v1423 = vpop.xlane.xlu0 %1422
          %1424 = vadd.xlane.f32.xlu0 %v1397
          %v1425 = vpop.xlane.xlu0 %1424
          %1426 = vadd.xlane.f32.xlu0 %v1398
          %v1427 = vpop.xlane.xlu0 %1426
          %1428 = vadd.xlane.f32.xlu0 %v1399
          %v1429 = vpop.xlane.xlu0 %1428
          %1430 = vadd.xlane.f32.xlu0 %v1400
          %v1431 = vpop.xlane.xlu0 %1430
          %1432 = vadd.xlane.f32.xlu0 %v1401
          %v1433 = vpop.xlane.xlu0 %1432
          %vm1434 = vcmask 7168
          %1435 = vst.msk [vmem:[%s383] sm:$0xff] %vm1434, %v1403
          %1436 = vst.msk [vmem:[%s383 + $0x8] sm:$0xff] %vm1434, %v1405
          %1437 = vst.msk [vmem:[%s383 + $0x10] sm:$0xff] %vm1434, %v1407
          %1438 = vst.msk [vmem:[%s383 + $0x18] sm:$0xff] %vm1434, %v1409
          %1439 = vst.msk [vmem:[%s383 + $0x20] sm:$0xff] %vm1434, %v1411
          %1440 = vst.msk [vmem:[%s383 + $0x28] sm:$0xff] %vm1434, %v1413
          %1441 = vst.msk [vmem:[%s383 + $0x30] sm:$0xff] %vm1434, %v1415
          %1442 = vst.msk [vmem:[%s383 + $0x38] sm:$0xff] %vm1434, %v1417
          %1443 = vst.msk [vmem:[%s383 + $0x40] sm:$0xff] %vm1434, %v1419
          %1444 = vst.msk [vmem:[%s383 + $0x48] sm:$0xff] %vm1434, %v1421
          %1445 = vst.msk [vmem:[%s383 + $0x50] sm:$0xff] %vm1434, %v1423
          %1446 = vst.msk [vmem:[%s383 + $0x58] sm:$0xff] %vm1434, %v1425
          %1447 = vst.msk [vmem:[%s383 + $0x60] sm:$0xff] %vm1434, %v1427
          %1448 = vst.msk [vmem:[%s383 + $0x68] sm:$0xff] %vm1434, %v1429
          %1449 = vst.msk [vmem:[%s383 + $0x70] sm:$0xff] %vm1434, %v1431
          %1450 = vst.msk [vmem:[%s383 + $0x78] sm:$0xff] %vm1434, %v1433
        $region75: #{tpu_custom_call.1} parent=58 // pred_fallthru
          _
        %s1451 = smul.u32 16, %s23
        %p1452 = scmp.lt.s32.totalorder %s1451, 63
        %s1453 = scalar_select %p1452, %s1451, 63
        %s1454 = smul.addr %s1453, 8
        %s1455 = scalar_lea.vmem %s5, %s1454
        // Predicated region
        $region76: #{tpu_custom_call.1} parent=58 // pred_check
          %p1456 = pneg %p181
        $region77: #{tpu_custom_call.1} parent=58 // pred_check_branch
          %1458 = sbr.rel (%p1456) target = $region79
        $region78: #{tpu_custom_call.1} parent=58 // pred_region
          %s1459 = smul.u32 16, %s23
        $region79: #{tpu_custom_call.1} parent=58 // pred_fallthru
          _
      $region59: #{tpu_custom_call.1} parent=5 // pred_fallthru
        _
      %p1460 = scmp.le.s32.totalorder 2, %s14
      // Predicated region
      $region80: #{tpu_custom_call.1} parent=5 // pred_check
        %p1461 = pneg %p1460
      $region81: #{tpu_custom_call.1} parent=5 // pred_check_branch
        %1463 = sbr.rel (%p1461) target = $region83
      $region82: #{tpu_custom_call.1} parent=5 // pred_region
        %s1464 = ssub.s32 %s14, 2
        // Predicated region
        $region84: #{tpu_custom_call.1} parent=82 // pred_check
          %p1465 = pneg %p187
        $region85: #{tpu_custom_call.1} parent=82 // pred_check_branch
          %1467 = sbr.rel (%p1465) target = $region87
        $region86: #{tpu_custom_call.1} parent=82 // pred_region
          %s1468 = smul.u32 16, %s25
          %p1469 = scmp.lt.s32.totalorder %s1468, 63
          %s1470 = scalar_select %p1469, %s1468, 63
          %s1471 = smul.addr %s1470, 8
          %s1472 = scalar_lea.vmem %s5, %s1471
        $region87: #{tpu_custom_call.1} parent=82 // pred_fallthru
          _
      $region83: #{tpu_custom_call.1} parent=5 // pred_fallthru
        _
    $region6: #{tpu_custom_call.1} parent=1 // loop_footer
      %s18 = sadd.s32 1, %s14
    $region7: #{tpu_custom_call.1} parent=1 // loop_footer_branch
      %13 = sbr.rel target = $region3
    $region8: #{tpu_custom_call.1} parent=1 // loop_exit
      _
    %1473 = vsyncpa [#allocation4], 1
    %s1474 = scalar_lea.sflag [#allocation4], 1
    %1475 = vsyncpa %s1474, 1

</llo_original>
